<compile_context>
chip_gen: v6e
topology: v6e:2x2x1
jax: 0.10.0
libtpu: 0.0.40
codegen_flags: <defaults>
</compile_context>

<pallas_src>
from functools import partial

import numpy as np
import jax
import jax.numpy as jnp
from jax.experimental import pallas as pl
from jax.experimental.pallas import tpu as pltpu


def _cdiv(a, b):
    return -(-a // b)


def _chip_settings():
    """(elementwise compute dtype, vmem_limit_bytes) chosen per TPU generation."""
    try:
        kind = jax.devices()[0].device_kind.lower()
    except Exception:
        kind = ""
    if "v6" in kind or "v7" in kind:
        # bf16 VALU available; v7x has only 64 MiB physical VMEM per TensorCore.
        return jnp.bfloat16, 48 * 1024 * 1024
    # v5e / older: no bf16 VPU -> keep f32 elementwise; 128 MiB physical VMEM.
    return jnp.float32, 96 * 1024 * 1024


# ----------------------------------------------------------------------------- kernels

def _pointnet_mlp_kernel(x_ref, w_ref, b_ref, out_ref, *,
                         segs, s_per_cloud, compute_dtype):
    """Whole MLP_1 -> MLP_2 -> per-cloud max-pool -> concat -> MLP_3 for Bt clouds.

    x_ref:  (Bt*S, cin_p) f32 block (Bt clouds, S points each, flattened).
    w_ref:  packed bf16 weight slab; `segs[name] = (row_off, rows, cols)` (static).
    b_ref:  (9, slab_w) f32 bias slab (layer i -> row i).
    """
    n_rows = x_ref.shape[0]
    bt = n_rows // s_per_cloud

    def matmul(h, name):
        off, ci, co = segs[name]
        return jnp.dot(h.astype(jnp.bfloat16), w_ref[off:off + ci, 0:co],
                       preferred_element_type=jnp.float32)

    def dense(h, name, layer, relu=True):
        co = segs[name][2]
        y = matmul(h, name).astype(compute_dtype)
        y = y + b_ref[layer:layer + 1, 0:co].astype(compute_dtype)
        return jnp.maximum(y, 0.0) if relu else y

    h = x_ref[...].astype(compute_dtype)                    # (Bt*S, cin_p)
    h1 = dense(dense(h, 'w0', 0), 'w1', 1)                  # MLP_1 -> (Bt*S, m1)
    h2 = dense(dense(dense(h1, 'w2', 2), 'w3', 3), 'w4', 4)  # MLP_2 -> (Bt*S, m2)
    m2 = h2.shape[1]

    # per-cloud global max pool
    g = jnp.max(h2.reshape(bt, s_per_cloud, m2), axis=1)    # (Bt, m2)

    # cat((G.repeat, b1_out), channel) @ W5  ==  G @ W5[:m2] + b1_out @ W5[m2:]
    c5 = segs['w5g'][2]
    gterm = matmul(g, 'w5g').astype(compute_dtype)           # (Bt, c5)
    hterm = matmul(h1, 'w5h').astype(compute_dtype)          # (Bt*S, c5)
    b5 = b_ref[5:6, 0:c5].astype(compute_dtype)
    h3 = jnp.maximum(hterm.reshape(bt, s_per_cloud, c5)
                     + gterm[:, None, :] + b5, 0.0).reshape(n_rows, c5)
    h3 = dense(h3, 'w6', 6)
    h3 = dense(h3, 'w7', 7)
    out_ref[...] = dense(h3, 'w8', 8, relu=False).astype(out_ref.dtype)


def _nearest_kernel(pT_ref, qp_ref, idx_ref, *, tile_m):
    """Streaming 1-NN: queries on the lane axis, VMEM-resident sampled slab.

    pT_ref:  (4, TQ)  query block with rows [-2x, -2y, -2z, 1].
    qp_ref:  (m_pad, 4) sampled slab [x, y, z, |q|^2]; padded rows carry 1e30.
    idx_ref: (8, TQ) int32 output block (row 0 is the answer; 8 rows keep the
             output write tile-aligned).
    """
    n_chunks = qp_ref.shape[0] // tile_m
    tq = idx_ref.shape[1]
    p = pT_ref[...]                                          # (4, TQ)

    def body(j, carry):
        best_d, best_i = carry
        base = pl.multiple_of(j * tile_m, tile_m)
        chunk = qp_ref[pl.ds(base, tile_m), :]               # (TM, 4)
        # one skinny matmul: |q|^2 - 2 q.p   (per-query |p|^2 dropped: same argmin)
        d = jnp.dot(chunk, p, preferred_element_type=jnp.float32)     # (TM, TQ)
        dmin = jnp.min(d, axis=0, keepdims=True)                      # (1, TQ)
        row = jax.lax.broadcasted_iota(jnp.int32, (tile_m, 1), 0) + j * tile_m
        imin = jnp.min(jnp.where(d <= dmin, row, jnp.int32(2 ** 30)),
                       axis=0, keepdims=True)                # lowest row hitting the min
        better = dmin < best_d                               # strict <: earlier chunk wins ties
        return (jnp.where(better, dmin, best_d),
                jnp.where(better, imin, best_i))

    init = (jnp.full((1, tq), jnp.inf, jnp.float32),
            jnp.zeros((1, tq), jnp.int32))
    _, best_i = jax.lax.fori_loop(0, n_chunks, body, init)
    idx_ref[...] = jnp.broadcast_to(best_i, (8, tq))


# ----------------------------------------------------------------------------- wrappers

def run_mlp(inp, params, num_classes, block_b=16):
    """inp: (B, S, Cin) float32 -> (B, S, num_classes) float32."""
    B, S, Cin = inp.shape
    cin_p = params['cin_p']
    c_pad = params['c_pad']
    compute_dtype, vmem_limit = _chip_settings()

    if Cin < cin_p:                                          # pad feature channels
        inp = jnp.concatenate(
            [inp, jnp.zeros((B, S, cin_p - Cin), inp.dtype)], axis=-1)

    # >=2 grid steps when B>=2 so both v7x TensorCores get work; large Bt for
    # big batches to amortize the ~0.35us per-grid-step overhead.
    Bt = max(1, min(block_b, _cdiv(B, 2)))
    Bp = _cdiv(B, Bt) * Bt
    if Bp != B:
        inp = jnp.concatenate(
            [inp, jnp.zeros((Bp - B, S, cin_p), inp.dtype)], axis=0)
    x2 = inp.reshape(Bp * S, cin_p)

    out = pl.pallas_call(
        partial(_pointnet_mlp_kernel, segs=params['segs'],
                s_per_cloud=S, compute_dtype=compute_dtype),
        out_shape=jax.ShapeDtypeStruct((Bp * S, c_pad), jnp.bfloat16),
        grid_spec=pltpu.PrefetchScalarGridSpec(
            num_scalar_prefetch=0,
            grid=(Bp // Bt,),
            in_specs=[pl.BlockSpec((Bt * S, cin_p), lambda b: (b, 0)),
                      pl.BlockSpec(params['w'].shape, lambda b: (0, 0)),
                      pl.BlockSpec(params['bias'].shape, lambda b: (0, 0))],
            out_specs=pl.BlockSpec((Bt * S, c_pad), lambda b: (b, 0)),
        ),
        compiler_params=pltpu.CompilerParams(
            dimension_semantics=("parallel",),
            vmem_limit_bytes=vmem_limit),
    )(x2, params['w'], params['bias'])
    return out.reshape(Bp, S, c_pad)[:B, :, :num_classes].astype(jnp.float32)


def run_nearest(pos, pos_sampled, tile_q=1024, tile_m=512):
    """For each point in pos (N, 3) return the index of its nearest sampled point (M, 3)."""
    n_points = pos.shape[0]
    M = pos_sampled.shape[0]
    nq = _cdiv(n_points, tile_q)
    nm = _cdiv(M, tile_m)
    n_pad, m_pad = nq * tile_q, nm * tile_m
    _, vmem_limit = _chip_settings()

    # queries packed as rows [-2x, -2y, -2z, 1]: one (TM,4)@(4,TQ) dot gives |q|^2 - 2 q.p
    pT = jnp.zeros((4, n_pad), jnp.float32)
    pT = pT.at[:3, :n_points].set(-2.0 * pos.T)
    pT = pT.at[3, :].set(1.0)

    # sampled slab [x, y, z, |q|^2]; padded rows get a huge |q|^2 so they never win
    qp = jnp.zeros((m_pad, 4), jnp.float32)
    qp = qp.at[:M, :3].set(pos_sampled)
    q2 = jnp.sum(pos_sampled * pos_sampled, axis=1)
    qp = qp.at[:, 3].set(
        jnp.full((m_pad,), 1e30, jnp.float32).at[:M].set(q2))

    idx = pl.pallas_call(
        partial(_nearest_kernel, tile_m=tile_m),
        out_shape=jax.ShapeDtypeStruct((8, n_pad), jnp.int32),
        grid_spec=pltpu.PrefetchScalarGridSpec(
            num_scalar_prefetch=0,
            grid=(nq,),
            in_specs=[pl.BlockSpec((4, tile_q), lambda i: (0, i)),
                      pl.BlockSpec((m_pad, 4), lambda i: (0, 0))],
            out_specs=pl.BlockSpec((8, tile_q), lambda i: (0, i)),
        ),
        compiler_params=pltpu.CompilerParams(
            dimension_semantics=("parallel",),
            vmem_limit_bytes=vmem_limit),
    )(pT, qp)
    return idx[0, :n_points]


def init_params(key, num_features, num_classes,
                MLP_1=(32, 64), MLP_2=(64, 128, 256), MLP_3=(128, 64, 32)):
    """Deterministic synthetic parameters (PyTorch Conv1d default init), BN folded (eval)."""
    assert len(MLP_1) == 2 and len(MLP_2) == 3 and len(MLP_3) == 3, \
        "kernel is specialized to the module's default layer structure"
    cin = num_features + 3
    cin_p = max(16, _cdiv(cin, 16) * 16)                     # 16-aligned (bf16 tiles)

    dims = []
    prev = cin
    for w in MLP_1:
        dims.append((prev, w)); prev = w
    m1 = prev
    for w in MLP_2:
        dims.append((prev, w)); prev = w
    m2 = prev
    prev = m1 + m2
    for w in MLP_3:
        dims.append((prev, w)); prev = w
    dims.append((prev, num_classes))                         # final conv, no BN / ReLU

    c_pad = max(128, _cdiv(num_classes, 128) * 128)          # lane-dense output channels
    slab_w = max(max(co for _, co in dims), c_pad)
    bn_scale = 1.0 / np.sqrt(1.0 + 1e-5)                     # gamma=1, beta=0, mean=0, var=1
    keys = jax.random.split(key, 2 * len(dims))

    Ws, bias = [], jnp.zeros((len(dims), slab_w), jnp.float32)
    for i, (ci, co) in enumerate(dims):
        k = 1.0 / np.sqrt(ci)
        W = jax.random.uniform(keys[2 * i], (ci, co), jnp.float32, -k, k)
        b = jax.random.uniform(keys[2 * i + 1], (co,), jnp.float32, -k, k)
        if i < len(dims) - 1:                                # layers followed by BatchNorm1d
            W = W * bn_scale
            b = b * bn_scale
        Ws.append(W)
        bias = bias.at[i, :co].set(b)

    # split MLP_3's first layer along input channels: [G (m2 rows) ; b1_out (m1 rows)]
    segments = [
        ('w0', jnp.zeros((cin_p, dims[0][1]), jnp.float32).at[:cin].set(Ws[0])),
        ('w1', Ws[1]), ('w2', Ws[2]), ('w3', Ws[3]), ('w4', Ws[4]),
        ('w5g', Ws[5][:m2]), ('w5h', Ws[5][m2:]),
        ('w6', Ws[6]), ('w7', Ws[7]),
        ('w8', jnp.zeros((dims[8][0], c_pad), jnp.float32).at[:, :num_classes].set(Ws[8])),
    ]
    segs, blocks, off = {}, [], 0
    for name, W in segments:
        r, co = W.shape
        segs[name] = (off, r, co)                            # static (row_off, rows, cols)
        blocks.append(jnp.zeros((r, slab_w), jnp.float32).at[:, :co].set(W))
        off += r                                             # all row counts multiples of 16
    w_slab = jnp.concatenate(blocks, axis=0).astype(jnp.bfloat16)

    return {'w': w_slab, 'bias': bias, 'segs': segs,
            'c_pad': c_pad, 'cin_p': cin_p, 'cin': cin}


def mlp_ref(inp, params, num_classes):
    """Pure-JAX f32 reference of the MLP stack (same bf16-stored weights)."""
    segs = params['segs']
    w = params['w'].astype(jnp.float32)
    b = params['bias']

    def lay(h, name, i, relu=True):
        off, ci, co = segs[name]
        y = h @ w[off:off + ci, :co] + b[i, :co]
        return jnp.maximum(y, 0.0) if relu else y

    pad = params['cin_p'] - inp.shape[-1]
    h = jnp.pad(inp, ((0, 0), (0, 0), (0, pad)))
    h1 = lay(lay(h, 'w0', 0), 'w1', 1)
    h2 = lay(lay(lay(h1, 'w2', 2), 'w3', 3), 'w4', 4)
    g = jnp.max(h2, axis=1, keepdims=True)
    o5g, r5g, c5 = segs['w5g']
    o5h, r5h, _ = segs['w5h']
    h3 = jnp.maximum(g @ w[o5g:o5g + r5g, :c5]
                     + h1 @ w[o5h:o5h + r5h, :c5] + b[5, :c5], 0.0)
    h3 = lay(h3, 'w6', 6)
    h3 = lay(h3, 'w7', 7)
    return lay(h3, 'w8', 8, relu=False)[..., :num_classes]


def pointnet_forward(params, x, pos, batch, ptr, subsample, num_classes, sample_key):
    """x: (n_points, F), pos: (n_points, 3), batch: (n_points,), ptr: (n_batch+1,)."""
    del batch  # points are contiguous per cloud (PyG convention); `ptr` gives the slices
    ptr = np.asarray(ptr)
    n_batch = ptr.shape[0] - 1

    input_all = jnp.concatenate([pos, x], axis=1).astype(jnp.float32)   # (n_points, 3 + F)

    # TODO(synk): np.random.choice replaced by deterministic jax.random.randint glue
    keys = jax.random.split(sample_key, n_batch)
    samples = []
    for i in range(n_batch):
        lo, hi = int(ptr[i]), int(ptr[i + 1])
        sel = jax.random.randint(keys[i], (subsample,), lo, hi)
        samples.append(jnp.take(input_all, sel, axis=0))
    inp = jnp.stack(samples, axis=0)                         # (B, S, 3 + F) f32

    pred = run_mlp(inp, params, num_classes)                 # (B, S, num_classes)
    pred_flat = pred.reshape(n_batch * subsample, num_classes)
    pos_sampled = inp[:, :, :3].reshape(n_batch * subsample, 3)

    closest = run_nearest(pos.astype(jnp.float32), pos_sampled)          # (n_points,)
    return jnp.take(pred_flat, closest, axis=0)              # (n_points, num_classes)


# ----------------------------------------------------------------------------- demo

if __name__ == "__main__":
    key = jax.random.PRNGKey(0)
    k_param, k_x, k_pos, k_sample, k_mlp = jax.random.split(key, 5)

    num_features = 4
    num_classes = 6
    subsample = 128

    counts = [120, 136]                                      # two small point clouds
    n_points = sum(counts)                                   # 256
    ptr = np.array([0] + list(np.cumsum(counts)), dtype=np.int32)
    batch = jnp.asarray(np.repeat(np.arange(len(counts)), counts).astype(np.int32))

    x = jax.random.normal(k_x, (n_points, num_features), jnp.float32)
    pos = jax.random.normal(k_pos, (n_points, 3), jnp.float32)

    params = init_params(k_param, num_features, num_classes)

    # full forward pass
    out = pointnet_forward(params, x, pos, batch, ptr, subsample, num_classes, k_sample)
    out = jax.block_until_ready(out)
    assert out.shape == (n_points, num_classes), out.shape
    assert bool(jnp.all(jnp.isfinite(out)))

    # MLP kernel vs. pure-JAX reference (loose tolerance: bf16 weights/activations)
    inp_test = jax.random.normal(k_mlp, (2, subsample, num_features + 3), jnp.float32)
    got = jax.block_until_ready(run_mlp(inp_test, params, num_classes))
    want = mlp_ref(inp_test, params, num_classes)
    assert bool(jnp.allclose(got, want, atol=0.15, rtol=0.1))

    # streaming 1-NN kernel with small tiles so the multi-chunk loop and nq>1
    # paths are exercised; verify chosen-neighbour distances are minimal.
    pos_s = jax.random.normal(jax.random.PRNGKey(7), (384, 3), jnp.float32)
    idx = jax.block_until_ready(run_nearest(pos, pos_s, tile_q=128, tile_m=128))
    d_full = jnp.sum((pos[:, None, :] - pos_s[None, :, :]) ** 2, axis=-1)
    d_pick = jnp.take_along_axis(d_full, idx[:, None], axis=1)[:, 0]
    assert bool(jnp.allclose(d_pick, jnp.min(d_full, axis=1), atol=1e-3, rtol=1e-3))

    print("KERNEL_OK")
</pallas_src>

<mosaic_0001>
module attributes {stable_mosaic.version = 11 : i64} {
  func.func @_pointnet_mlp_kernel(%arg0: i32, %arg1: memref<128x16xf32, #tpu.memory_space<vmem>>, %arg2: memref<848x256xbf16, #tpu.memory_space<vmem>>, %arg3: memref<9x256xf32, #tpu.memory_space<vmem>>, %arg4: memref<128x128xbf16, #tpu.memory_space<vmem>>) attributes {dimension_semantics = [#tpu.dimension_semantics<parallel>], iteration_bounds = array<i64: 2>, scalar_prefetch = 0 : i64, scratch_operands = 0 : i64, tpu.core_type = #tpu.core_type<tc>, window_params = [{transform_indices = @transform_0, window_bounds = array<i64: 128, 16>}, {pipeline_mode = #tpu.pipeline_mode<synchronous>, transform_indices = @transform_1, window_bounds = array<i64: 848, 256>}, {pipeline_mode = #tpu.pipeline_mode<synchronous>, transform_indices = @transform_2, window_bounds = array<i64: 9, 256>}, {transform_indices = @transform_3, window_bounds = array<i64: 128, 128>}]} {
    %c0 = arith.constant 0 : index
    %c0_0 = arith.constant 0 : index
    %0 = vector.load %arg1[%c0, %c0_0] : memref<128x16xf32, #tpu.memory_space<vmem>>, vector<128x16xf32>
    %1 = arith.truncf %0 : vector<128x16xf32> to vector<128x16xbf16>
    %c0_1 = arith.constant 0 : index
    %c0_2 = arith.constant 0 : index
    %2 = vector.load %arg2[%c0_1, %c0_2] : memref<848x256xbf16, #tpu.memory_space<vmem>>, vector<16x32xbf16>
    %cst = arith.constant dense<0.000000e+00> : vector<128x32xf32>
    %3 = tpu.matmul %1, %2, %cst {dimension_numbers = #tpu.dot_dimension_numbers<[1], [0], [0], [1], [0, 0, 1, 1], [], []>} : vector<128x16xbf16>, vector<16x32xbf16>, vector<128x32xf32> -> vector<128x32xf32>
    %c0_3 = arith.constant 0 : index
    %c0_4 = arith.constant 0 : index
    %4 = vector.load %arg3[%c0_3, %c0_4] : memref<9x256xf32, #tpu.memory_space<vmem>>, vector<1x32xf32>
    %5 = vector.broadcast %4 : vector<1x32xf32> to vector<128x32xf32>
    %6 = arith.addf %3, %5 : vector<128x32xf32>
    %cst_5 = arith.constant 0.000000e+00 : f32
    %7 = vector.broadcast %cst_5 : f32 to vector<128x32xf32>
    %8 = arith.maximumf %6, %7 : vector<128x32xf32>
    %9 = arith.truncf %8 : vector<128x32xf32> to vector<128x32xbf16>
    %c16 = arith.constant 16 : index
    %c0_6 = arith.constant 0 : index
    %10 = vector.load %arg2[%c16, %c0_6] : memref<848x256xbf16, #tpu.memory_space<vmem>>, vector<32x64xbf16>
    %cst_7 = arith.constant dense<0.000000e+00> : vector<128x64xf32>
    %11 = tpu.matmul %9, %10, %cst_7 {dimension_numbers = #tpu.dot_dimension_numbers<[1], [0], [0], [1], [0, 0, 1, 1], [], []>} : vector<128x32xbf16>, vector<32x64xbf16>, vector<128x64xf32> -> vector<128x64xf32>
    %c1 = arith.constant 1 : index
    %c0_8 = arith.constant 0 : index
    %12 = vector.load %arg3[%c1, %c0_8] : memref<9x256xf32, #tpu.memory_space<vmem>>, vector<1x64xf32>
    %13 = vector.broadcast %12 : vector<1x64xf32> to vector<128x64xf32>
    %14 = arith.addf %11, %13 : vector<128x64xf32>
    %cst_9 = arith.constant 0.000000e+00 : f32
    %15 = vector.broadcast %cst_9 : f32 to vector<128x64xf32>
    %16 = arith.maximumf %14, %15 : vector<128x64xf32>
    %17 = arith.truncf %16 : vector<128x64xf32> to vector<128x64xbf16>
    %c48 = arith.constant 48 : index
    %c0_10 = arith.constant 0 : index
    %18 = vector.load %arg2[%c48, %c0_10] : memref<848x256xbf16, #tpu.memory_space<vmem>>, vector<64x64xbf16>
    %cst_11 = arith.constant dense<0.000000e+00> : vector<128x64xf32>
    %19 = tpu.matmul %17, %18, %cst_11 {dimension_numbers = #tpu.dot_dimension_numbers<[1], [0], [0], [1], [0, 0, 1, 1], [], []>} : vector<128x64xbf16>, vector<64x64xbf16>, vector<128x64xf32> -> vector<128x64xf32>
    %c2 = arith.constant 2 : index
    %c0_12 = arith.constant 0 : index
    %20 = vector.load %arg3[%c2, %c0_12] : memref<9x256xf32, #tpu.memory_space<vmem>>, vector<1x64xf32>
    %21 = vector.broadcast %20 : vector<1x64xf32> to vector<128x64xf32>
    %22 = arith.addf %19, %21 : vector<128x64xf32>
    %cst_13 = arith.constant 0.000000e+00 : f32
    %23 = vector.broadcast %cst_13 : f32 to vector<128x64xf32>
    %24 = arith.maximumf %22, %23 : vector<128x64xf32>
    %25 = arith.truncf %24 : vector<128x64xf32> to vector<128x64xbf16>
    %c112 = arith.constant 112 : index
    %c0_14 = arith.constant 0 : index
    %26 = vector.load %arg2[%c112, %c0_14] : memref<848x256xbf16, #tpu.memory_space<vmem>>, vector<64x128xbf16>
    %cst_15 = arith.constant dense<0.000000e+00> : vector<128x128xf32>
    %27 = tpu.matmul %25, %26, %cst_15 {dimension_numbers = #tpu.dot_dimension_numbers<[1], [0], [0], [1], [0, 0, 1, 1], [], []>} : vector<128x64xbf16>, vector<64x128xbf16>, vector<128x128xf32> -> vector<128x128xf32>
    %c3 = arith.constant 3 : index
    %c0_16 = arith.constant 0 : index
    %28 = vector.load %arg3[%c3, %c0_16] : memref<9x256xf32, #tpu.memory_space<vmem>>, vector<1x128xf32>
    %29 = vector.broadcast %28 : vector<1x128xf32> to vector<128x128xf32>
    %30 = arith.addf %27, %29 : vector<128x128xf32>
    %cst_17 = arith.constant 0.000000e+00 : f32
    %31 = vector.broadcast %cst_17 : f32 to vector<128x128xf32>
    %32 = arith.maximumf %30, %31 : vector<128x128xf32>
    %33 = arith.truncf %32 : vector<128x128xf32> to vector<128x128xbf16>
    %c176 = arith.constant 176 : index
    %c0_18 = arith.constant 0 : index
    %34 = vector.load %arg2[%c176, %c0_18] : memref<848x256xbf16, #tpu.memory_space<vmem>>, vector<128x256xbf16>
    %cst_19 = arith.constant dense<0.000000e+00> : vector<128x256xf32>
    %35 = tpu.matmul %33, %34, %cst_19 {dimension_numbers = #tpu.dot_dimension_numbers<[1], [0], [0], [1], [0, 0, 1, 1], [], []>} : vector<128x128xbf16>, vector<128x256xbf16>, vector<128x256xf32> -> vector<128x256xf32>
    %c4 = arith.constant 4 : index
    %c0_20 = arith.constant 0 : index
    %36 = vector.load %arg3[%c4, %c0_20] : memref<9x256xf32, #tpu.memory_space<vmem>>, vector<1x256xf32>
    %37 = vector.broadcast %36 : vector<1x256xf32> to vector<128x256xf32>
    %38 = arith.addf %35, %37 : vector<128x256xf32>
    %cst_21 = arith.constant 0.000000e+00 : f32
    %39 = vector.broadcast %cst_21 : f32 to vector<128x256xf32>
    %40 = arith.maximumf %38, %39 : vector<128x256xf32>
    %41 = vector.shape_cast %40 : vector<128x256xf32> to vector<1x128x256xf32>
    %cst_22 = arith.constant dense<0xFF800000> : vector<1x256xf32>
    %42 = vector.multi_reduction <maximumf>, %41, %cst_22 [1] : vector<1x128x256xf32> to vector<1x256xf32>
    %43 = arith.truncf %42 : vector<1x256xf32> to vector<1x256xbf16>
    %c304 = arith.constant 304 : index
    %c0_23 = arith.constant 0 : index
    %44 = vector.load %arg2[%c304, %c0_23] : memref<848x256xbf16, #tpu.memory_space<vmem>>, vector<256x128xbf16>
    %cst_24 = arith.constant dense<0.000000e+00> : vector<1x128xf32>
    %45 = tpu.matmul %43, %44, %cst_24 {dimension_numbers = #tpu.dot_dimension_numbers<[1], [0], [0], [1], [0, 0, 1, 1], [], []>} : vector<1x256xbf16>, vector<256x128xbf16>, vector<1x128xf32> -> vector<1x128xf32>
    %46 = arith.truncf %16 : vector<128x64xf32> to vector<128x64xbf16>
    %c560 = arith.constant 560 : index
    %c0_25 = arith.constant 0 : index
    %47 = vector.load %arg2[%c560, %c0_25] : memref<848x256xbf16, #tpu.memory_space<vmem>>, vector<64x128xbf16>
    %cst_26 = arith.constant dense<0.000000e+00> : vector<128x128xf32>
    %48 = tpu.matmul %46, %47, %cst_26 {dimension_numbers = #tpu.dot_dimension_numbers<[1], [0], [0], [1], [0, 0, 1, 1], [], []>} : vector<128x64xbf16>, vector<64x128xbf16>, vector<128x128xf32> -> vector<128x128xf32>
    %c5 = arith.constant 5 : index
    %c0_27 = arith.constant 0 : index
    %49 = vector.load %arg3[%c5, %c0_27] : memref<9x256xf32, #tpu.memory_space<vmem>>, vector<1x128xf32>
    %50 = vector.shape_cast %48 : vector<128x128xf32> to vector<1x128x128xf32>
    %51 = vector.shape_cast %45 : vector<1x128xf32> to vector<1x1x128xf32>
    %52 = vector.broadcast %51 : vector<1x1x128xf32> to vector<1x128x128xf32>
    %53 = arith.addf %50, %52 : vector<1x128x128xf32>
    %54 = vector.shape_cast %49 : vector<1x128xf32> to vector<1x1x128xf32>
    %55 = vector.broadcast %54 : vector<1x1x128xf32> to vector<1x128x128xf32>
    %56 = arith.addf %53, %55 : vector<1x128x128xf32>
    %cst_28 = arith.constant 0.000000e+00 : f32
    %57 = vector.broadcast %cst_28 : f32 to vector<1x128x128xf32>
    %58 = arith.maximumf %56, %57 : vector<1x128x128xf32>
    %59 = vector.shape_cast %58 : vector<1x128x128xf32> to vector<128x128xf32>
    %60 = arith.truncf %59 : vector<128x128xf32> to vector<128x128xbf16>
    %c624 = arith.constant 624 : index
    %c0_29 = arith.constant 0 : index
    %61 = vector.load %arg2[%c624, %c0_29] : memref<848x256xbf16, #tpu.memory_space<vmem>>, vector<128x64xbf16>
    %cst_30 = arith.constant dense<0.000000e+00> : vector<128x64xf32>
    %62 = tpu.matmul %60, %61, %cst_30 {dimension_numbers = #tpu.dot_dimension_numbers<[1], [0], [0], [1], [0, 0, 1, 1], [], []>} : vector<128x128xbf16>, vector<128x64xbf16>, vector<128x64xf32> -> vector<128x64xf32>
    %c6 = arith.constant 6 : index
    %c0_31 = arith.constant 0 : index
    %63 = vector.load %arg3[%c6, %c0_31] : memref<9x256xf32, #tpu.memory_space<vmem>>, vector<1x64xf32>
    %64 = vector.broadcast %63 : vector<1x64xf32> to vector<128x64xf32>
    %65 = arith.addf %62, %64 : vector<128x64xf32>
    %cst_32 = arith.constant 0.000000e+00 : f32
    %66 = vector.broadcast %cst_32 : f32 to vector<128x64xf32>
    %67 = arith.maximumf %65, %66 : vector<128x64xf32>
    %68 = arith.truncf %67 : vector<128x64xf32> to vector<128x64xbf16>
    %c752 = arith.constant 752 : index
    %c0_33 = arith.constant 0 : index
    %69 = vector.load %arg2[%c752, %c0_33] : memref<848x256xbf16, #tpu.memory_space<vmem>>, vector<64x32xbf16>
    %cst_34 = arith.constant dense<0.000000e+00> : vector<128x32xf32>
    %70 = tpu.matmul %68, %69, %cst_34 {dimension_numbers = #tpu.dot_dimension_numbers<[1], [0], [0], [1], [0, 0, 1, 1], [], []>} : vector<128x64xbf16>, vector<64x32xbf16>, vector<128x32xf32> -> vector<128x32xf32>
    %c7 = arith.constant 7 : index
    %c0_35 = arith.constant 0 : index
    %71 = vector.load %arg3[%c7, %c0_35] : memref<9x256xf32, #tpu.memory_space<vmem>>, vector<1x32xf32>
    %72 = vector.broadcast %71 : vector<1x32xf32> to vector<128x32xf32>
    %73 = arith.addf %70, %72 : vector<128x32xf32>
    %cst_36 = arith.constant 0.000000e+00 : f32
    %74 = vector.broadcast %cst_36 : f32 to vector<128x32xf32>
    %75 = arith.maximumf %73, %74 : vector<128x32xf32>
    %76 = arith.truncf %75 : vector<128x32xf32> to vector<128x32xbf16>
    %c816 = arith.constant 816 : index
    %c0_37 = arith.constant 0 : index
    %77 = vector.load %arg2[%c816, %c0_37] : memref<848x256xbf16, #tpu.memory_space<vmem>>, vector<32x128xbf16>
    %cst_38 = arith.constant dense<0.000000e+00> : vector<128x128xf32>
    %78 = tpu.matmul %76, %77, %cst_38 {dimension_numbers = #tpu.dot_dimension_numbers<[1], [0], [0], [1], [0, 0, 1, 1], [], []>} : vector<128x32xbf16>, vector<32x128xbf16>, vector<128x128xf32> -> vector<128x128xf32>
    %c8 = arith.constant 8 : index
    %c0_39 = arith.constant 0 : index
    %79 = vector.load %arg3[%c8, %c0_39] : memref<9x256xf32, #tpu.memory_space<vmem>>, vector<1x128xf32>
    %80 = vector.broadcast %79 : vector<1x128xf32> to vector<128x128xf32>
    %81 = arith.addf %78, %80 : vector<128x128xf32>
    %82 = arith.truncf %81 : vector<128x128xf32> to vector<128x128xbf16>
    %c0_40 = arith.constant 0 : index
    %c0_41 = arith.constant 0 : index
    %83 = vector.load %arg4[%c0_40, %c0_41] : memref<128x128xbf16, #tpu.memory_space<vmem>>, vector<128x128xbf16>
    tpu.vector_store %arg4[%c0_40, %c0_41], %82 {strides = array<i32>} : memref<128x128xbf16, #tpu.memory_space<vmem>>, vector<128x128xbf16>,
    return
  }
  func.func @transform_0(%arg0: i32) -> (i32, i32) {
    %c0_i32 = arith.constant 0 : i32
    %c0_i32_0 = arith.constant 0 : i32
    return %arg0, %c0_i32 : i32, i32
  }
  func.func @transform_1(%arg0: i32) -> (i32, i32) {
    %c0_i32 = arith.constant 0 : i32
    %c0_i32_0 = arith.constant 0 : i32
    %c0_i32_1 = arith.constant 0 : i32
    return %c0_i32, %c0_i32_0 : i32, i32
  }
  func.func @transform_2(%arg0: i32) -> (i32, i32) {
    %c0_i32 = arith.constant 0 : i32
    %c0_i32_0 = arith.constant 0 : i32
    %c0_i32_1 = arith.constant 0 : i32
    return %c0_i32, %c0_i32_0 : i32, i32
  }
  func.func @transform_3(%arg0: i32) -> (i32, i32) {
    %c0_i32 = arith.constant 0 : i32
    %c0_i32_0 = arith.constant 0 : i32
    return %arg0, %c0_i32 : i32, i32
  }
}

</mosaic_0001>

<llo_original>
// kernel: tpu_custom_call.1
$region0: #{tpu_custom_call.1}
  #allocation0 [shape = 'u32[]', space=smem, size = 0x4, offset = 0x4, fixed_abs, tag = 'smem constant byte address 0x4 - core index']
  #allocation1 [shape = 'u32[144,128]{1,0:T(1,128)}', space=vmem, size = 0x12000, scoped, tag = 'internal scratch']
  %s0 = inlined_call_operand.vmem [shape: f32[256,16], index: 0, kind: input, shape index: {}]
  %s1 = inlined_call_operand.hbm [shape: bf16[848,256], index: 1, kind: input, shape index: {}]
  %s2 = inlined_call_operand.vmem [shape: f32[9,256], index: 2, kind: input, shape index: {}]
  %s3 = inlined_call_operand.hbm [shape: bf16[256,128], index: 3, kind: output, shape index: {}]
  %s4 = sld [smem:[#allocation0]]
  $region49: #{tpu_custom_call.1} parent=0
    _
  %s6 = ssub.s32 1, %s4
  %s7 = scalar_select 0, %s6, %s4
  $region1: #{tpu_custom_call.1} parent=0
    #allocation2 [shape = 'u8[434176]{0}', space=vmem, size = 0x6a000, scoped, tag = 'input window, operand 1, single buffered']
    #allocation3 [shape = 's32[2]{0}', space=sflag, size = 0x8, scoped, tag = 'scoped memory for tpu_custom_call.1']
    #allocation4 [shape = 's32[2]{0}', space=sflag, size = 0x8, scoped, tag = 'scoped memory for tpu_custom_call.1']
    #allocation5 [shape = 'u8[65536]{0}', space=vmem, size = 0x10000, scoped, tag = 'output window, operand 0']
    %8 = vsyncpa [#allocation3], 0
    %9 = vsyncpa [#allocation4], 0
    %s10 = scalar_lea.sflag [#allocation4], 1
    %11 = vsyncpa %s10, 0
    loop: start=0, step=1, limit=4
    $region2: #{tpu_custom_call.1} parent=1 // loop_pre_header
      _
    $region3: #{tpu_custom_call.1} parent=1 // loop_header
      %s13 = sphi 0, %s17
      %p14 = scmp.ge.s32.totalorder %s13, 4
      %s23 = sphi 0, %s25
      %s26 = sphi 0, %s23
      %s27 = sphi 0, %s26
      %s43 = sphi 0, %s27
      %s47 = sphi 0, %s47
      %s49 = sphi 0, %s47
      %s50 = sphi 0, %s49
      %s64 = sphi 0, %s50
      %s68 = sphi 0, %s68
      %s70 = sphi 0, %s68
      %s71 = sphi 0, %s70
      %s85 = sphi 0, %s71
      %s91 = sphi 0, %s93
      %s94 = sphi 0, %s91
      %s95 = sphi 0, %s94
      %s111 = sphi 0, %s95
    $region4: #{tpu_custom_call.1} parent=1 // loop_header_branch
      %16 = sbr.rel (%p14) target = $region8
    $region5: #{tpu_custom_call.1} parent=1 // loop_body
      %s18 = ssub.s32 %s13, 1
      %s19 = ssub.s32 %s13, 2
      %s20 = sadd.s32 %s13, 1
      %s21 = ssub.s32 %s13, %s20
      %p22 = scmp.eq.s32.totalorder %s21, 0
      %s24 = sadd.s32 %s23, 1
      %s25 = scalar_select %p22, %s23, %s24
      %p28 = pneg %p22
      %p29 = scmp.eq.s32.totalorder %s13, 1
      %p30 = por %p28, %p29
      %p31 = scmp.ne.s32.totalorder %s23, %s26
      %p32 = scmp.eq.s32.totalorder %s13, 0
      %p33 = por %p31, %p32
      %p34 = scmp.ne.s32.totalorder %s23, %s26
      %p35 = scmp.eq.s32.totalorder %s18, 1
      %p36 = por %p34, %p35
      %p37 = scmp.ne.s32.totalorder %s26, %s27
      %p38 = scmp.eq.s32.totalorder %s18, 0
      %p39 = por %p37, %p38
      %p40 = scmp.ne.s32.totalorder %s26, %s27
      %p41 = scmp.eq.s32.totalorder %s19, 1
      %p42 = por %p40, %p41
      %p44 = scmp.ne.s32.totalorder %s27, %s43
      %p45 = scmp.eq.s32.totalorder %s19, 0
      %p46 = por %p44, %p45
      %s48 = sadd.s32 %s47, 1
      %p51 = scmp.eq.s32.totalorder %s13, 1
      %p52 = scmp.ne.s32.totalorder %s47, %s49
      %p53 = scmp.eq.s32.totalorder %s13, 0
      %p54 = por %p52, %p53
      %p55 = scmp.ne.s32.totalorder %s47, %s49
      %p56 = scmp.eq.s32.totalorder %s18, 1
      %p57 = por %p55, %p56
      %p58 = scmp.ne.s32.totalorder %s49, %s50
      %p59 = scmp.eq.s32.totalorder %s18, 0
      %p60 = por %p58, %p59
      %p61 = scmp.ne.s32.totalorder %s49, %s50
      %p62 = scmp.eq.s32.totalorder %s19, 1
      %p63 = por %p61, %p62
      %p65 = scmp.ne.s32.totalorder %s50, %s64
      %p66 = scmp.eq.s32.totalorder %s19, 0
      %p67 = por %p65, %p66
      %s69 = sadd.s32 %s68, 1
      %p72 = scmp.eq.s32.totalorder %s13, 1
      %p73 = scmp.ne.s32.totalorder %s68, %s70
      %p74 = scmp.eq.s32.totalorder %s13, 0
      %p75 = por %p73, %p74
      %p76 = scmp.ne.s32.totalorder %s68, %s70
      %p77 = scmp.eq.s32.totalorder %s18, 1
      %p78 = por %p76, %p77
      %p79 = scmp.ne.s32.totalorder %s70, %s71
      %p80 = scmp.eq.s32.totalorder %s18, 0
      %p81 = por %p79, %p80
      %p82 = scmp.ne.s32.totalorder %s70, %s71
      %p83 = scmp.eq.s32.totalorder %s19, 1
      %p84 = por %p82, %p83
      %p86 = scmp.ne.s32.totalorder %s71, %s85
      %p87 = scmp.eq.s32.totalorder %s19, 0
      %p88 = por %p86, %p87
      %s89 = ssub.s32 %s13, %s20
      %p90 = scmp.eq.s32.totalorder %s89, 0
      %s92 = sadd.s32 %s91, 1
      %s93 = scalar_select %p90, %s91, %s92
      %p96 = pneg %p90
      %p97 = scmp.eq.s32.totalorder %s13, 1
      %p98 = por %p96, %p97
      %p99 = scmp.ne.s32.totalorder %s91, %s94
      %p100 = scmp.eq.s32.totalorder %s13, 0
      %p101 = por %p99, %p100
      %p102 = scmp.ne.s32.totalorder %s91, %s94
      %p103 = scmp.eq.s32.totalorder %s18, 1
      %p104 = por %p102, %p103
      %p105 = scmp.ne.s32.totalorder %s94, %s95
      %p106 = scmp.eq.s32.totalorder %s18, 0
      %p107 = por %p105, %p106
      %p108 = scmp.ne.s32.totalorder %s94, %s95
      %p109 = scmp.eq.s32.totalorder %s19, 1
      %p110 = por %p108, %p109
      %p112 = scmp.ne.s32.totalorder %s95, %s111
      %p113 = scmp.eq.s32.totalorder %s19, 0
      %p114 = por %p112, %p113
      %p115 = scmp.le.s32.totalorder 1, %s13
      %p116 = scmp.lt.s32.totalorder %s13, 3
      %p117 = pnand %p115, %p116
      %p118 = pneg %p117
      // Predicated region
      $region9: #{tpu_custom_call.1} parent=5 // pred_check
        _
      $region10: #{tpu_custom_call.1} parent=5 // pred_check_branch
        %120 = sbr.rel (%p117) target = $region12
      $region11: #{tpu_custom_call.1} parent=5 // pred_region
        %s121 = ssub.s32 %s13, 1
        // Predicated region
        $region13: #{tpu_custom_call.1} parent=11 // pred_check
          %p122 = pneg %p60
        $region14: #{tpu_custom_call.1} parent=11 // pred_check_branch
          %124 = sbr.rel (%p122) target = $region16
        $region15: #{tpu_custom_call.1} parent=11 // pred_region
          %s126 = ssub.s32 13568, 13568
          %127 = vsyncadd [#allocation3], %s126
          %s128 = sshll.u32 [#allocation2], 4
          %s129 = int_to_ptr.vmem [resolvable:$true] %s128
          %134 = dma.hbm_to_vmem [thread:$0]  %s1, 13568, %s129, [#allocation3], 128, 128, 8
        $region16: #{tpu_custom_call.1} parent=11 // pred_fallthru
          _
        // Predicated region
        $region17: #{tpu_custom_call.1} parent=11 // pred_check
          %p135 = pneg %p81
        $region18: #{tpu_custom_call.1} parent=11 // pred_check_branch
          %137 = sbr.rel (%p135) target = $region20
        $region19: #{tpu_custom_call.1} parent=11 // pred_region
          _
        $region20: #{tpu_custom_call.1} parent=11 // pred_fallthru
          _
      $region12: #{tpu_custom_call.1} parent=5 // pred_fallthru
        _
      %p138 = scmp.lt.s32.totalorder %s13, 2
      // Predicated region
      $region21: #{tpu_custom_call.1} parent=5 // pred_check
        %p139 = pneg %p138
      $region22: #{tpu_custom_call.1} parent=5 // pred_check_branch
        %141 = sbr.rel (%p139) target = $region24
      $region23: #{tpu_custom_call.1} parent=5 // pred_region
        // Predicated region
        $region25: #{tpu_custom_call.1} parent=23 // pred_check
          %p142 = pneg %p33
        $region26: #{tpu_custom_call.1} parent=23 // pred_check_branch
          %144 = sbr.rel (%p142) target = $region28
        $region27: #{tpu_custom_call.1} parent=23 // pred_region
          %s145 = smul.u32 16, %s13
          %p146 = scmp.lt.s32.totalorder %s145, 31
          %s147 = scalar_select %p146, %s145, 31
          %s148 = smul.addr %s147, 8
          %s149 = scalar_lea.vmem %s0, %s148
          %s150 = smul.u32 16, %s13
        $region28: #{tpu_custom_call.1} parent=23 // pred_fallthru
          _
      $region24: #{tpu_custom_call.1} parent=5 // pred_fallthru
        _
      %p151 = scmp.le.s32.totalorder 1, %s13
      %p152 = scmp.lt.s32.totalorder %s13, 3
      %p153 = pnand %p151, %p152
      %p154 = pneg %p153
      // Predicated region
      $region29: #{tpu_custom_call.1} parent=5 // pred_check
        _
      $region30: #{tpu_custom_call.1} parent=5 // pred_check_branch
        %156 = sbr.rel (%p153) target = $region32
      $region31: #{tpu_custom_call.1} parent=5 // pred_region
        %s157 = ssub.s32 %s13, 1
        // Predicated region
        $region33: #{tpu_custom_call.1} parent=31 // pred_check
          %p158 = pneg %p60
        $region34: #{tpu_custom_call.1} parent=31 // pred_check_branch
          %160 = sbr.rel (%p158) target = $region36
        $region35: #{tpu_custom_call.1} parent=31 // pred_region
          %161 = dma.done [#allocation3], 13568
        $region36: #{tpu_custom_call.1} parent=31 // pred_fallthru
          _
        %s162 = smul.u32 16, %s18
        %p163 = scmp.lt.s32.totalorder %s162, 31
        %s164 = scalar_select %p163, %s162, 31
        %s165 = smul.addr %s164, 8
        %s166 = scalar_lea.vmem %s0, %s165
        %p167 = pneg %p39
        %p168 = pneg %p36
        %p169 = pneg %p60
        %p170 = pneg %p57
        %p171 = pneg %p81
        %p172 = pneg %p78
        %p173 = pneg %p107
        %p174 = pneg %p104
        %s175 = sand.u32 %s94, 1
        %s176 = scalar_lea.sflag [#allocation4], %s175
        %s177 = sand.u32 %s94, 1
        %s178 = smul.addr %s177, 64
        %s179 = scalar_lea.vmem [#allocation5], %s178
        %s180 = smul.u32 16, %s18
        %p181 = scmp.lt.s32.totalorder %s180, 31
        %s182 = scalar_select %p181, %s180, 31
        %s183 = smul.addr %s182, 8
        %s184 = scalar_lea.vmem %s0, %s183
        %s185 = smul.u32 16, %s18
        %s186 = smul.u32 16, %s18
        %v188 = vld [vmem:[%s184] sm:$0xff]
        %v189 = vld [vmem:[%s184 + $0x8] sm:$0xff]
        %v190 = vld [vmem:[%s184 + $0x10] sm:$0xff]
        %v191 = vld [vmem:[%s184 + $0x18] sm:$0xff]
        %v192 = vld [vmem:[%s184 + $0x20] sm:$0xff]
        %v193 = vld [vmem:[%s184 + $0x28] sm:$0xff]
        %v194 = vld [vmem:[%s184 + $0x30] sm:$0xff]
        %v195 = vld [vmem:[%s184 + $0x38] sm:$0xff]
        %v196 = vld [vmem:[%s184 + $0x40] sm:$0xff]
        %v197 = vld [vmem:[%s184 + $0x48] sm:$0xff]
        %v198 = vld [vmem:[%s184 + $0x50] sm:$0xff]
        %v199 = vld [vmem:[%s184 + $0x58] sm:$0xff]
        %v200 = vld [vmem:[%s184 + $0x60] sm:$0xff]
        %v201 = vld [vmem:[%s184 + $0x68] sm:$0xff]
        %v202 = vld [vmem:[%s184 + $0x70] sm:$0xff]
        %v203 = vld [vmem:[%s184 + $0x78] sm:$0xff]
        %v204 = vpack.c.bf16 %v189, %v188
        %v205 = vpack.c.bf16 %v191, %v190
        %v206 = vpack.c.bf16 %v193, %v192
        %v207 = vpack.c.bf16 %v195, %v194
        %v208 = vpack.c.bf16 %v197, %v196
        %v209 = vpack.c.bf16 %v199, %v198
        %v210 = vpack.c.bf16 %v201, %v200
        %v211 = vpack.c.bf16 %v203, %v202
        %v212 = vld [vmem:[#allocation2] sm:$0xf]
        %v213 = vld [vmem:[#allocation2 + $0x8] sm:$0xf]
        %v214 = vld [vmem:[%s2] ss:$0 sm:$0xff]
        %v217 = vunpack.c.l.b16 %v212
        %v218 = vunpack.c.l.b16 %v213
        %v219 = vpack.c.b16 %v218, %v217
        %vm221 = vcmask 130048
        %v223 = vsel %vm221, %v204, 0
        %v226 = vsel %vm221, %v205, 0
        %v229 = vsel %vm221, %v206, 0
        %v232 = vsel %vm221, %v207, 0
        %v235 = vsel %vm221, %v208, 0
        %v238 = vsel %vm221, %v209, 0
        %v241 = vsel %vm221, %v210, 0
        %v244 = vsel %vm221, %v211, 0
        %246 = vmatprep.subr.bf16.mxu0 0
        %247 = vmatpush1.bf16.msra.mxu0 0
        %248 = vmatprep.subr.bf16.mxu0 0
        %249 = vmatpush1.bf16.msra.mxu0 0
        %250 = vmatprep.subr.bf16.mxu0 0
        %251 = vmatpush1.bf16.msra.mxu0 0
        %252 = vmatprep.subr.bf16.mxu0 0
        %253 = vmatpush1.bf16.msra.mxu0 0
        %254 = vmatprep.subr.bf16.mxu0 0
        %255 = vmatpush1.bf16.msra.mxu0 0
        %256 = vmatprep.subr.bf16.mxu0 0
        %257 = vmatpush1.bf16.msra.mxu0 0
        %258 = vmatprep.subr.bf16.mxu0 0
        %259 = vmatpush1.bf16.msra.mxu0 0
        %260 = vmatprep.subr.bf16.mxu0 0
        %261 = vmatpush1.bf16.msra.mxu0 %v219
        %262 = vmatprep.subr.bf16.mxu0 0
        %263 = vmatpush2.bf16.msra.mxu0 0
        %264 = vmatprep.subr.bf16.mxu0 0
        %265 = vmatpush2.bf16.msra.mxu0 0
        %266 = vmatprep.subr.bf16.mxu0 0
        %267 = vmatpush2.bf16.msra.mxu0 0
        %268 = vmatprep.subr.bf16.mxu0 0
        %269 = vmatpush2.bf16.msra.mxu0 0
        %270 = vmatprep.subr.bf16.mxu0 0
        %271 = vmatpush2.bf16.msra.mxu0 0
        %272 = vmatprep.subr.bf16.mxu0 0
        %273 = vmatpush2.bf16.msra.mxu0 0
        %274 = vmatprep.subr.bf16.mxu0 0
        %275 = vmatpush2.bf16.msra.mxu0 0
        %276 = vmatprep.subr.bf16.mxu0 0
        %277 = vmatpush2.bf16.msra.mxu0 0
        %278 = vmatprep.mubr.bf16.mxu0 0
        %279 = vmatmul.mubr.bf16.gmra.mxu0 %v223
        %v280 = vpop.f32.mrf.mxu0
        %v281 = vadd.f32 %v214, %v280
        %v282 = vpop.f32.mrf.mxu0
        %v283 = vpop.f32.mrf.mxu0
        %v284 = vadd.f32 %v214, %v283
        %v285 = vpop.f32.mrf.mxu0
        %286 = vmatprep.mubr.bf16.mxu0 0
        %287 = vmatmul.mubr.bf16.gmra.mxu0 %v226
        %v288 = vpop.f32.mrf.mxu0
        %v289 = vadd.f32 %v214, %v288
        %v290 = vpop.f32.mrf.mxu0
        %v291 = vpop.f32.mrf.mxu0
        %v292 = vadd.f32 %v214, %v291
        %v293 = vpop.f32.mrf.mxu0
        %294 = vmatprep.mubr.bf16.mxu0 0
        %295 = vmatmul.mubr.bf16.gmra.mxu0 %v229
        %v296 = vpop.f32.mrf.mxu0
        %v297 = vadd.f32 %v214, %v296
        %v298 = vpop.f32.mrf.mxu0
        %v299 = vpop.f32.mrf.mxu0
        %v300 = vadd.f32 %v214, %v299
        %v301 = vpop.f32.mrf.mxu0
        %302 = vmatprep.mubr.bf16.mxu0 0
        %303 = vmatmul.mubr.bf16.gmra.mxu0 %v232
        %v304 = vpop.f32.mrf.mxu0
        %v305 = vadd.f32 %v214, %v304
        %v306 = vpop.f32.mrf.mxu0
        %v307 = vpop.f32.mrf.mxu0
        %v308 = vadd.f32 %v214, %v307
        %v309 = vpop.f32.mrf.mxu0
        %310 = vmatprep.mubr.bf16.mxu0 0
        %311 = vmatmul.mubr.bf16.gmra.mxu0 %v235
        %v312 = vpop.f32.mrf.mxu0
        %v313 = vadd.f32 %v214, %v312
        %v314 = vpop.f32.mrf.mxu0
        %v315 = vpop.f32.mrf.mxu0
        %v316 = vadd.f32 %v214, %v315
        %v317 = vpop.f32.mrf.mxu0
        %318 = vmatprep.mubr.bf16.mxu0 0
        %319 = vmatmul.mubr.bf16.gmra.mxu0 %v238
        %v320 = vpop.f32.mrf.mxu0
        %v321 = vadd.f32 %v214, %v320
        %v322 = vpop.f32.mrf.mxu0
        %v323 = vpop.f32.mrf.mxu0
        %v324 = vadd.f32 %v214, %v323
        %v325 = vpop.f32.mrf.mxu0
        %326 = vmatprep.mubr.bf16.mxu0 0
        %327 = vmatmul.mubr.bf16.gmra.mxu0 %v241
        %v328 = vpop.f32.mrf.mxu0
        %v329 = vadd.f32 %v214, %v328
        %v330 = vpop.f32.mrf.mxu0
        %v331 = vpop.f32.mrf.mxu0
        %v332 = vadd.f32 %v214, %v331
        %v333 = vpop.f32.mrf.mxu0
        %334 = vmatprep.mubr.bf16.mxu0 0
        %335 = vmatmul.mubr.bf16.gmra.mxu0 %v244
        %v336 = vpop.f32.mrf.mxu0
        %v337 = vadd.f32 %v214, %v336
        %v338 = vpop.f32.mrf.mxu0
        %v339 = vpop.f32.mrf.mxu0
        %v340 = vadd.f32 %v214, %v339
        %v341 = vpop.f32.mrf.mxu0
        %342 = vdwg.mxu0
        %v343 = vmax.f32 %v281, 0.0
        %v344 = vmax.f32 %v284, 0.0
        %v345 = vmax.f32 %v289, 0.0
        %v346 = vmax.f32 %v292, 0.0
        %v347 = vmax.f32 %v297, 0.0
        %v348 = vmax.f32 %v300, 0.0
        %v349 = vmax.f32 %v305, 0.0
        %v350 = vmax.f32 %v308, 0.0
        %v351 = vmax.f32 %v313, 0.0
        %v352 = vmax.f32 %v316, 0.0
        %v353 = vmax.f32 %v321, 0.0
        %v354 = vmax.f32 %v324, 0.0
        %v355 = vmax.f32 %v329, 0.0
        %v356 = vmax.f32 %v332, 0.0
        %v357 = vmax.f32 %v337, 0.0
        %v358 = vmax.f32 %v340, 0.0
        %v359 = vpack.c.bf16 %v344, %v343
        %v360 = vpack.c.bf16 %v346, %v345
        %v361 = vpack.c.bf16 %v348, %v347
        %v362 = vpack.c.bf16 %v350, %v349
        %v363 = vpack.c.bf16 %v352, %v351
        %v364 = vpack.c.bf16 %v354, %v353
        %v365 = vpack.c.bf16 %v356, %v355
        %v366 = vpack.c.bf16 %v358, %v357
        %v367 = vld [vmem:[#allocation2 + $0x10] sm:$0xf]
        %v368 = vld [vmem:[#allocation2 + $0x18] sm:$0xf]
        %v369 = vld [vmem:[#allocation2 + $0x20] sm:$0xf]
        %v370 = vld [vmem:[#allocation2 + $0x28] sm:$0xf]
        %v371 = vld [vmem:[%s2 + $0x1] ss:$0 sm:$0xff]
        %v376 = vunpack.c.l.b16 %v367
        %v377 = vunpack.c.l.b16 %v368
        %v378 = vunpack.c.l.b16 %v369
        %v379 = vunpack.c.l.b16 %v370
        %v380 = vpack.c.b16 %v377, %v376
        %v381 = vpack.c.b16 %v379, %v378
        %vm384 = vcmask 261120
        %v386 = vsel %vm384, %v359, 0
        %v389 = vsel %vm384, %v360, 0
        %v392 = vsel %vm384, %v361, 0
        %v395 = vsel %vm384, %v362, 0
        %v398 = vsel %vm384, %v363, 0
        %v401 = vsel %vm384, %v364, 0
        %v404 = vsel %vm384, %v365, 0
        %v407 = vsel %vm384, %v366, 0
        %409 = vmatprep.subr.bf16.mxu0 0
        %410 = vmatpush1.bf16.msra.mxu0 0
        %411 = vmatprep.subr.bf16.mxu0 0
        %412 = vmatpush1.bf16.msra.mxu0 0
        %413 = vmatprep.subr.bf16.mxu0 0
        %414 = vmatpush1.bf16.msra.mxu0 0
        %415 = vmatprep.subr.bf16.mxu0 0
        %416 = vmatpush1.bf16.msra.mxu0 0
        %417 = vmatprep.subr.bf16.mxu0 0
        %418 = vmatpush1.bf16.msra.mxu0 0
        %419 = vmatprep.subr.bf16.mxu0 0
        %420 = vmatpush1.bf16.msra.mxu0 0
        %421 = vmatprep.subr.bf16.mxu0 0
        %422 = vmatpush1.bf16.msra.mxu0 %v381
        %423 = vmatprep.subr.bf16.mxu0 0
        %424 = vmatpush1.bf16.msra.mxu0 %v380
        %425 = vmatprep.subr.bf16.mxu0 0
        %426 = vmatpush2.bf16.msra.mxu0 0
        %427 = vmatprep.subr.bf16.mxu0 0
        %428 = vmatpush2.bf16.msra.mxu0 0
        %429 = vmatprep.subr.bf16.mxu0 0
        %430 = vmatpush2.bf16.msra.mxu0 0
        %431 = vmatprep.subr.bf16.mxu0 0
        %432 = vmatpush2.bf16.msra.mxu0 0
        %433 = vmatprep.subr.bf16.mxu0 0
        %434 = vmatpush2.bf16.msra.mxu0 0
        %435 = vmatprep.subr.bf16.mxu0 0
        %436 = vmatpush2.bf16.msra.mxu0 0
        %437 = vmatprep.subr.bf16.mxu0 0
        %438 = vmatpush2.bf16.msra.mxu0 0
        %439 = vmatprep.subr.bf16.mxu0 0
        %440 = vmatpush2.bf16.msra.mxu0 0
        %441 = vmatprep.mubr.bf16.mxu0 0
        %442 = vmatmul.mubr.bf16.gmra.mxu0 %v386
        %v443 = vpop.f32.mrf.mxu0
        %v444 = vadd.f32 %v371, %v443
        %v445 = vpop.f32.mrf.mxu0
        %v446 = vpop.f32.mrf.mxu0
        %v447 = vadd.f32 %v371, %v446
        %v448 = vpop.f32.mrf.mxu0
        %449 = vmatprep.mubr.bf16.mxu0 0
        %450 = vmatmul.mubr.bf16.gmra.mxu0 %v389
        %v451 = vpop.f32.mrf.mxu0
        %v452 = vadd.f32 %v371, %v451
        %v453 = vpop.f32.mrf.mxu0
        %v454 = vpop.f32.mrf.mxu0
        %v455 = vadd.f32 %v371, %v454
        %v456 = vpop.f32.mrf.mxu0
        %457 = vmatprep.mubr.bf16.mxu0 0
        %458 = vmatmul.mubr.bf16.gmra.mxu0 %v392
        %v459 = vpop.f32.mrf.mxu0
        %v460 = vadd.f32 %v371, %v459
        %v461 = vpop.f32.mrf.mxu0
        %v462 = vpop.f32.mrf.mxu0
        %v463 = vadd.f32 %v371, %v462
        %v464 = vpop.f32.mrf.mxu0
        %465 = vmatprep.mubr.bf16.mxu0 0
        %466 = vmatmul.mubr.bf16.gmra.mxu0 %v395
        %v467 = vpop.f32.mrf.mxu0
        %v468 = vadd.f32 %v371, %v467
        %v469 = vpop.f32.mrf.mxu0
        %v470 = vpop.f32.mrf.mxu0
        %v471 = vadd.f32 %v371, %v470
        %v472 = vpop.f32.mrf.mxu0
        %473 = vmatprep.mubr.bf16.mxu0 0
        %474 = vmatmul.mubr.bf16.gmra.mxu0 %v398
        %v475 = vpop.f32.mrf.mxu0
        %v476 = vadd.f32 %v371, %v475
        %v477 = vpop.f32.mrf.mxu0
        %v478 = vpop.f32.mrf.mxu0
        %v479 = vadd.f32 %v371, %v478
        %v480 = vpop.f32.mrf.mxu0
        %481 = vmatprep.mubr.bf16.mxu0 0
        %482 = vmatmul.mubr.bf16.gmra.mxu0 %v401
        %v483 = vpop.f32.mrf.mxu0
        %v484 = vadd.f32 %v371, %v483
        %v485 = vpop.f32.mrf.mxu0
        %v486 = vpop.f32.mrf.mxu0
        %v487 = vadd.f32 %v371, %v486
        %v488 = vpop.f32.mrf.mxu0
        %489 = vmatprep.mubr.bf16.mxu0 0
        %490 = vmatmul.mubr.bf16.gmra.mxu0 %v404
        %v491 = vpop.f32.mrf.mxu0
        %v492 = vadd.f32 %v371, %v491
        %v493 = vpop.f32.mrf.mxu0
        %v494 = vpop.f32.mrf.mxu0
        %v495 = vadd.f32 %v371, %v494
        %v496 = vpop.f32.mrf.mxu0
        %497 = vmatprep.mubr.bf16.mxu0 0
        %498 = vmatmul.mubr.bf16.gmra.mxu0 %v407
        %v499 = vpop.f32.mrf.mxu0
        %v500 = vadd.f32 %v371, %v499
        %v501 = vpop.f32.mrf.mxu0
        %v502 = vpop.f32.mrf.mxu0
        %v503 = vadd.f32 %v371, %v502
        %v504 = vpop.f32.mrf.mxu0
        %505 = vdwg.mxu0
        %v506 = vmax.f32 %v444, 0.0
        %v507 = vmax.f32 %v447, 0.0
        %v508 = vmax.f32 %v452, 0.0
        %v509 = vmax.f32 %v455, 0.0
        %v510 = vmax.f32 %v460, 0.0
        %v511 = vmax.f32 %v463, 0.0
        %v512 = vmax.f32 %v468, 0.0
        %v513 = vmax.f32 %v471, 0.0
        %v514 = vmax.f32 %v476, 0.0
        %v515 = vmax.f32 %v479, 0.0
        %v516 = vmax.f32 %v484, 0.0
        %v517 = vmax.f32 %v487, 0.0
        %v518 = vmax.f32 %v492, 0.0
        %v519 = vmax.f32 %v495, 0.0
        %v520 = vmax.f32 %v500, 0.0
        %v521 = vmax.f32 %v503, 0.0
        %v522 = vpack.c.bf16 %v507, %v506
        %v523 = vpack.c.bf16 %v509, %v508
        %v524 = vpack.c.bf16 %v511, %v510
        %v525 = vpack.c.bf16 %v513, %v512
        %v526 = vpack.c.bf16 %v515, %v514
        %v527 = vpack.c.bf16 %v517, %v516
        %v528 = vpack.c.bf16 %v519, %v518
        %v529 = vpack.c.bf16 %v521, %v520
        %v530 = vld [vmem:[#allocation2 + $0x30] sm:$0xf]
        %v531 = vld [vmem:[#allocation2 + $0x38] sm:$0xf]
        %v532 = vld [vmem:[#allocation2 + $0x40] sm:$0xf]
        %v533 = vld [vmem:[#allocation2 + $0x48] sm:$0xf]
        %v534 = vld [vmem:[#allocation2 + $0x50] sm:$0xf]
        %v535 = vld [vmem:[#allocation2 + $0x58] sm:$0xf]
        %v536 = vld [vmem:[#allocation2 + $0x60] sm:$0xf]
        %v537 = vld [vmem:[#allocation2 + $0x68] sm:$0xf]
        %v538 = vld [vmem:[%s2 + $0x2] ss:$0 sm:$0xff]
        %v547 = vunpack.c.l.b16 %v530
        %v548 = vunpack.c.l.b16 %v531
        %v549 = vunpack.c.l.b16 %v532
        %v550 = vunpack.c.l.b16 %v533
        %v551 = vunpack.c.l.b16 %v534
        %v552 = vunpack.c.l.b16 %v535
        %v553 = vunpack.c.l.b16 %v536
        %v554 = vunpack.c.l.b16 %v537
        %v555 = vpack.c.b16 %v548, %v547
        %v556 = vpack.c.b16 %v550, %v549
        %v557 = vpack.c.b16 %v552, %v551
        %v558 = vpack.c.b16 %v554, %v553
        %vm563 = vcmask 523264
        %v565 = vsel %vm563, %v522, 0
        %v568 = vsel %vm563, %v523, 0
        %v571 = vsel %vm563, %v524, 0
        %v574 = vsel %vm563, %v525, 0
        %v577 = vsel %vm563, %v526, 0
        %v580 = vsel %vm563, %v527, 0
        %v583 = vsel %vm563, %v528, 0
        %v586 = vsel %vm563, %v529, 0
        %588 = vmatprep.subr.bf16.mxu0 0
        %589 = vmatpush1.bf16.msra.mxu0 0
        %590 = vmatprep.subr.bf16.mxu0 0
        %591 = vmatpush1.bf16.msra.mxu0 0
        %592 = vmatprep.subr.bf16.mxu0 0
        %593 = vmatpush1.bf16.msra.mxu0 0
        %594 = vmatprep.subr.bf16.mxu0 0
        %595 = vmatpush1.bf16.msra.mxu0 0
        %596 = vmatprep.subr.bf16.mxu0 0
        %597 = vmatpush1.bf16.msra.mxu0 %v558
        %598 = vmatprep.subr.bf16.mxu0 0
        %599 = vmatpush1.bf16.msra.mxu0 %v557
        %600 = vmatprep.subr.bf16.mxu0 0
        %601 = vmatpush1.bf16.msra.mxu0 %v556
        %602 = vmatprep.subr.bf16.mxu0 0
        %603 = vmatpush1.bf16.msra.mxu0 %v555
        %604 = vmatprep.subr.bf16.mxu0 0
        %605 = vmatpush2.bf16.msra.mxu0 0
        %606 = vmatprep.subr.bf16.mxu0 0
        %607 = vmatpush2.bf16.msra.mxu0 0
        %608 = vmatprep.subr.bf16.mxu0 0
        %609 = vmatpush2.bf16.msra.mxu0 0
        %610 = vmatprep.subr.bf16.mxu0 0
        %611 = vmatpush2.bf16.msra.mxu0 0
        %612 = vmatprep.subr.bf16.mxu0 0
        %613 = vmatpush2.bf16.msra.mxu0 0
        %614 = vmatprep.subr.bf16.mxu0 0
        %615 = vmatpush2.bf16.msra.mxu0 0
        %616 = vmatprep.subr.bf16.mxu0 0
        %617 = vmatpush2.bf16.msra.mxu0 0
        %618 = vmatprep.subr.bf16.mxu0 0
        %619 = vmatpush2.bf16.msra.mxu0 0
        %620 = vmatprep.mubr.bf16.mxu0 0
        %621 = vmatmul.mubr.bf16.gmra.mxu0 %v565
        %v622 = vpop.f32.mrf.mxu0
        %v623 = vadd.f32 %v538, %v622
        %v624 = vpop.f32.mrf.mxu0
        %v625 = vpop.f32.mrf.mxu0
        %v626 = vadd.f32 %v538, %v625
        %v627 = vpop.f32.mrf.mxu0
        %628 = vmatprep.mubr.bf16.mxu0 0
        %629 = vmatmul.mubr.bf16.gmra.mxu0 %v568
        %v630 = vpop.f32.mrf.mxu0
        %v631 = vadd.f32 %v538, %v630
        %v632 = vpop.f32.mrf.mxu0
        %v633 = vpop.f32.mrf.mxu0
        %v634 = vadd.f32 %v538, %v633
        %v635 = vpop.f32.mrf.mxu0
        %636 = vmatprep.mubr.bf16.mxu0 0
        %637 = vmatmul.mubr.bf16.gmra.mxu0 %v571
        %v638 = vpop.f32.mrf.mxu0
        %v639 = vadd.f32 %v538, %v638
        %v640 = vpop.f32.mrf.mxu0
        %v641 = vpop.f32.mrf.mxu0
        %v642 = vadd.f32 %v538, %v641
        %v643 = vpop.f32.mrf.mxu0
        %644 = vmatprep.mubr.bf16.mxu0 0
        %645 = vmatmul.mubr.bf16.gmra.mxu0 %v574
        %v646 = vpop.f32.mrf.mxu0
        %v647 = vadd.f32 %v538, %v646
        %v648 = vpop.f32.mrf.mxu0
        %v649 = vpop.f32.mrf.mxu0
        %v650 = vadd.f32 %v538, %v649
        %v651 = vpop.f32.mrf.mxu0
        %652 = vmatprep.mubr.bf16.mxu0 0
        %653 = vmatmul.mubr.bf16.gmra.mxu0 %v577
        %v654 = vpop.f32.mrf.mxu0
        %v655 = vadd.f32 %v538, %v654
        %v656 = vpop.f32.mrf.mxu0
        %v657 = vpop.f32.mrf.mxu0
        %v658 = vadd.f32 %v538, %v657
        %v659 = vpop.f32.mrf.mxu0
        %660 = vmatprep.mubr.bf16.mxu0 0
        %661 = vmatmul.mubr.bf16.gmra.mxu0 %v580
        %v662 = vpop.f32.mrf.mxu0
        %v663 = vadd.f32 %v538, %v662
        %v664 = vpop.f32.mrf.mxu0
        %v665 = vpop.f32.mrf.mxu0
        %v666 = vadd.f32 %v538, %v665
        %v667 = vpop.f32.mrf.mxu0
        %668 = vmatprep.mubr.bf16.mxu0 0
        %669 = vmatmul.mubr.bf16.gmra.mxu0 %v583
        %v670 = vpop.f32.mrf.mxu0
        %v671 = vadd.f32 %v538, %v670
        %v672 = vpop.f32.mrf.mxu0
        %v673 = vpop.f32.mrf.mxu0
        %v674 = vadd.f32 %v538, %v673
        %v675 = vpop.f32.mrf.mxu0
        %676 = vmatprep.mubr.bf16.mxu0 0
        %677 = vmatmul.mubr.bf16.gmra.mxu0 %v586
        %v678 = vpop.f32.mrf.mxu0
        %v679 = vadd.f32 %v538, %v678
        %v680 = vpop.f32.mrf.mxu0
        %v681 = vpop.f32.mrf.mxu0
        %v682 = vadd.f32 %v538, %v681
        %v683 = vpop.f32.mrf.mxu0
        %684 = vdwg.mxu0
        %v685 = vmax.f32 %v623, 0.0
        %v686 = vmax.f32 %v626, 0.0
        %v687 = vmax.f32 %v631, 0.0
        %v688 = vmax.f32 %v634, 0.0
        %v689 = vmax.f32 %v639, 0.0
        %v690 = vmax.f32 %v642, 0.0
        %v691 = vmax.f32 %v647, 0.0
        %v692 = vmax.f32 %v650, 0.0
        %v693 = vmax.f32 %v655, 0.0
        %v694 = vmax.f32 %v658, 0.0
        %v695 = vmax.f32 %v663, 0.0
        %v696 = vmax.f32 %v666, 0.0
        %v697 = vmax.f32 %v671, 0.0
        %v698 = vmax.f32 %v674, 0.0
        %v699 = vmax.f32 %v679, 0.0
        %v700 = vmax.f32 %v682, 0.0
        %v701 = vpack.c.bf16 %v686, %v685
        %v702 = vpack.c.bf16 %v688, %v687
        %v703 = vpack.c.bf16 %v690, %v689
        %v704 = vpack.c.bf16 %v692, %v691
        %v705 = vpack.c.bf16 %v694, %v693
        %v706 = vpack.c.bf16 %v696, %v695
        %v707 = vpack.c.bf16 %v698, %v697
        %v708 = vpack.c.bf16 %v700, %v699
        %v709 = vld [vmem:[#allocation2 + $0x70] sm:$0xf]
        %v710 = vld [vmem:[#allocation2 + $0x78] sm:$0xf]
        %v711 = vld [vmem:[#allocation2 + $0x80] sm:$0xf]
        %v712 = vld [vmem:[#allocation2 + $0x88] sm:$0xf]
        %v713 = vld [vmem:[#allocation2 + $0x90] sm:$0xf]
        %v714 = vld [vmem:[#allocation2 + $0x98] sm:$0xf]
        %v715 = vld [vmem:[#allocation2 + $0xa0] sm:$0xf]
        %v716 = vld [vmem:[#allocation2 + $0xa8] sm:$0xf]
        %v717 = vld [vmem:[%s2 + $0x3] ss:$0 sm:$0xff]
        %v726 = vunpack.c.l.b16 %v709
        %v727 = vunpack.c.l.b16 %v710
        %v728 = vunpack.c.l.b16 %v711
        %v729 = vunpack.c.l.b16 %v712
        %v730 = vunpack.c.l.b16 %v713
        %v731 = vunpack.c.l.b16 %v714
        %v732 = vunpack.c.l.b16 %v715
        %v733 = vunpack.c.l.b16 %v716
        %v734 = vpack.c.b16 %v727, %v726
        %v735 = vpack.c.b16 %v729, %v728
        %v736 = vpack.c.b16 %v731, %v730
        %v737 = vpack.c.b16 %v733, %v732
        %v743 = vsel %vm563, %v701, 0
        %v746 = vsel %vm563, %v702, 0
        %v749 = vsel %vm563, %v703, 0
        %v752 = vsel %vm563, %v704, 0
        %v755 = vsel %vm563, %v705, 0
        %v758 = vsel %vm563, %v706, 0
        %v761 = vsel %vm563, %v707, 0
        %v764 = vsel %vm563, %v708, 0
        %766 = vmatprep.subr.bf16.mxu0 0
        %767 = vmatpush1.bf16.msra.mxu0 0
        %768 = vmatprep.subr.bf16.mxu0 0
        %769 = vmatpush1.bf16.msra.mxu0 0
        %770 = vmatprep.subr.bf16.mxu0 0
        %771 = vmatpush1.bf16.msra.mxu0 0
        %772 = vmatprep.subr.bf16.mxu0 0
        %773 = vmatpush1.bf16.msra.mxu0 0
        %774 = vmatprep.subr.bf16.mxu0 0
        %775 = vmatpush1.bf16.msra.mxu0 %v737
        %776 = vmatprep.subr.bf16.mxu0 0
        %777 = vmatpush1.bf16.msra.mxu0 %v736
        %778 = vmatprep.subr.bf16.mxu0 0
        %779 = vmatpush1.bf16.msra.mxu0 %v735
        %780 = vmatprep.subr.bf16.mxu0 0
        %781 = vmatpush1.bf16.msra.mxu0 %v734
        %782 = vmatprep.subr.bf16.mxu0 0
        %783 = vmatpush2.bf16.msra.mxu0 0
        %784 = vmatprep.subr.bf16.mxu0 0
        %785 = vmatpush2.bf16.msra.mxu0 0
        %786 = vmatprep.subr.bf16.mxu0 0
        %787 = vmatpush2.bf16.msra.mxu0 0
        %788 = vmatprep.subr.bf16.mxu0 0
        %789 = vmatpush2.bf16.msra.mxu0 0
        %790 = vmatprep.subr.bf16.mxu0 0
        %791 = vmatpush2.bf16.msra.mxu0 0
        %792 = vmatprep.subr.bf16.mxu0 0
        %793 = vmatpush2.bf16.msra.mxu0 0
        %794 = vmatprep.subr.bf16.mxu0 0
        %795 = vmatpush2.bf16.msra.mxu0 0
        %796 = vmatprep.subr.bf16.mxu0 0
        %797 = vmatpush2.bf16.msra.mxu0 0
        %798 = vmatprep.mubr.bf16.mxu0 0
        %799 = vmatmul.mubr.bf16.gmra.mxu0 %v743
        %v800 = vpop.f32.mrf.mxu0
        %v801 = vadd.f32 %v717, %v800
        %v802 = vpop.f32.mrf.mxu0
        %v803 = vpop.f32.mrf.mxu0
        %v804 = vadd.f32 %v717, %v803
        %v805 = vpop.f32.mrf.mxu0
        %806 = vmatprep.mubr.bf16.mxu0 0
        %807 = vmatmul.mubr.bf16.gmra.mxu0 %v746
        %v808 = vpop.f32.mrf.mxu0
        %v809 = vadd.f32 %v717, %v808
        %v810 = vpop.f32.mrf.mxu0
        %v811 = vpop.f32.mrf.mxu0
        %v812 = vadd.f32 %v717, %v811
        %v813 = vpop.f32.mrf.mxu0
        %814 = vmatprep.mubr.bf16.mxu0 0
        %815 = vmatmul.mubr.bf16.gmra.mxu0 %v749
        %v816 = vpop.f32.mrf.mxu0
        %v817 = vadd.f32 %v717, %v816
        %v818 = vpop.f32.mrf.mxu0
        %v819 = vpop.f32.mrf.mxu0
        %v820 = vadd.f32 %v717, %v819
        %v821 = vpop.f32.mrf.mxu0
        %822 = vmatprep.mubr.bf16.mxu0 0
        %823 = vmatmul.mubr.bf16.gmra.mxu0 %v752
        %v824 = vpop.f32.mrf.mxu0
        %v825 = vadd.f32 %v717, %v824
        %v826 = vpop.f32.mrf.mxu0
        %v827 = vpop.f32.mrf.mxu0
        %v828 = vadd.f32 %v717, %v827
        %v829 = vpop.f32.mrf.mxu0
        %830 = vmatprep.mubr.bf16.mxu0 0
        %831 = vmatmul.mubr.bf16.gmra.mxu0 %v755
        %v832 = vpop.f32.mrf.mxu0
        %v833 = vadd.f32 %v717, %v832
        %v834 = vpop.f32.mrf.mxu0
        %v835 = vpop.f32.mrf.mxu0
        %v836 = vadd.f32 %v717, %v835
        %v837 = vpop.f32.mrf.mxu0
        %838 = vmatprep.mubr.bf16.mxu0 0
        %839 = vmatmul.mubr.bf16.gmra.mxu0 %v758
        %v840 = vpop.f32.mrf.mxu0
        %v841 = vadd.f32 %v717, %v840
        %v842 = vpop.f32.mrf.mxu0
        %v843 = vpop.f32.mrf.mxu0
        %v844 = vadd.f32 %v717, %v843
        %v845 = vpop.f32.mrf.mxu0
        %846 = vmatprep.mubr.bf16.mxu0 0
        %847 = vmatmul.mubr.bf16.gmra.mxu0 %v761
        %v848 = vpop.f32.mrf.mxu0
        %v849 = vadd.f32 %v717, %v848
        %v850 = vpop.f32.mrf.mxu0
        %v851 = vpop.f32.mrf.mxu0
        %v852 = vadd.f32 %v717, %v851
        %v853 = vpop.f32.mrf.mxu0
        %854 = vmatprep.mubr.bf16.mxu0 0
        %855 = vmatmul.mubr.bf16.gmra.mxu0 %v764
        %v856 = vpop.f32.mrf.mxu0
        %v857 = vadd.f32 %v717, %v856
        %v858 = vpop.f32.mrf.mxu0
        %v859 = vpop.f32.mrf.mxu0
        %v860 = vadd.f32 %v717, %v859
        %v861 = vpop.f32.mrf.mxu0
        %862 = vdwg.mxu0
        %v863 = vmax.f32 %v801, 0.0
        %v864 = vmax.f32 %v804, 0.0
        %v865 = vmax.f32 %v809, 0.0
        %v866 = vmax.f32 %v812, 0.0
        %v867 = vmax.f32 %v817, 0.0
        %v868 = vmax.f32 %v820, 0.0
        %v869 = vmax.f32 %v825, 0.0
        %v870 = vmax.f32 %v828, 0.0
        %v871 = vmax.f32 %v833, 0.0
        %v872 = vmax.f32 %v836, 0.0
        %v873 = vmax.f32 %v841, 0.0
        %v874 = vmax.f32 %v844, 0.0
        %v875 = vmax.f32 %v849, 0.0
        %v876 = vmax.f32 %v852, 0.0
        %v877 = vmax.f32 %v857, 0.0
        %v878 = vmax.f32 %v860, 0.0
        %v879 = vpack.c.bf16 %v864, %v863
        %v880 = vpack.c.bf16 %v866, %v865
        %v881 = vpack.c.bf16 %v868, %v867
        %v882 = vpack.c.bf16 %v870, %v869
        %v883 = vpack.c.bf16 %v872, %v871
        %v884 = vpack.c.bf16 %v874, %v873
        %v885 = vpack.c.bf16 %v876, %v875
        %v886 = vpack.c.bf16 %v878, %v877
        %v887 = vld [vmem:[#allocation2 + $0xb0] sm:$0xff]
        %v888 = vld [vmem:[#allocation2 + $0xb8] sm:$0xff]
        %v889 = vld [vmem:[#allocation2 + $0xc0] sm:$0xff]
        %v890 = vld [vmem:[#allocation2 + $0xc8] sm:$0xff]
        %v891 = vld [vmem:[#allocation2 + $0xd0] sm:$0xff]
        %v892 = vld [vmem:[#allocation2 + $0xd8] sm:$0xff]
        %v893 = vld [vmem:[#allocation2 + $0xe0] sm:$0xff]
        %v894 = vld [vmem:[#allocation2 + $0xe8] sm:$0xff]
        %v895 = vld [vmem:[#allocation2 + $0xf0] sm:$0xff]
        %v896 = vld [vmem:[#allocation2 + $0xf8] sm:$0xff]
        %v897 = vld [vmem:[#allocation2 + $0x100] sm:$0xff]
        %v898 = vld [vmem:[#allocation2 + $0x108] sm:$0xff]
        %v899 = vld [vmem:[#allocation2 + $0x110] sm:$0xff]
        %v900 = vld [vmem:[#allocation2 + $0x118] sm:$0xff]
        %v901 = vld [vmem:[#allocation2 + $0x120] sm:$0xff]
        %v902 = vld [vmem:[#allocation2 + $0x128] sm:$0xff]
        %s903 = scalar_lea.vmem %s2, 4
        %v904 = vld [vmem:[%s903] ss:$8 sm:$0x3]
        %v906 = vlaneseq
        %v907 = vshrl.u32 %v906, 7
        %v908 = vsub.s32 0, %v907
        %v909 = vrot.slane %v904, %v908
        %v910 = vlaneseq
        %v911 = vshrl.u32 %v910, 7
        %v912 = vsub.s32 1, %v911
        %v913 = vrot.slane %v904, %v912
        %v932 = vunpack.c.l.b16 %v887
        %v933 = vunpack.c.h.b16 %v887
        %v934 = vunpack.c.l.b16 %v888
        %v935 = vunpack.c.h.b16 %v888
        %v936 = vunpack.c.l.b16 %v889
        %v937 = vunpack.c.h.b16 %v889
        %v938 = vunpack.c.l.b16 %v890
        %v939 = vunpack.c.h.b16 %v890
        %v940 = vunpack.c.l.b16 %v891
        %v941 = vunpack.c.h.b16 %v891
        %v942 = vunpack.c.l.b16 %v892
        %v943 = vunpack.c.h.b16 %v892
        %v944 = vunpack.c.l.b16 %v893
        %v945 = vunpack.c.h.b16 %v893
        %v946 = vunpack.c.l.b16 %v894
        %v947 = vunpack.c.h.b16 %v894
        %v948 = vunpack.c.l.b16 %v895
        %v949 = vunpack.c.h.b16 %v895
        %v950 = vunpack.c.l.b16 %v896
        %v951 = vunpack.c.h.b16 %v896
        %v952 = vunpack.c.l.b16 %v897
        %v953 = vunpack.c.h.b16 %v897
        %v954 = vunpack.c.l.b16 %v898
        %v955 = vunpack.c.h.b16 %v898
        %v956 = vunpack.c.l.b16 %v899
        %v957 = vunpack.c.h.b16 %v899
        %v958 = vunpack.c.l.b16 %v900
        %v959 = vunpack.c.h.b16 %v900
        %v960 = vunpack.c.l.b16 %v901
        %v961 = vunpack.c.h.b16 %v901
        %v962 = vunpack.c.l.b16 %v902
        %v963 = vunpack.c.h.b16 %v902
        %v964 = vpack.c.b16 %v934, %v932
        %v965 = vpack.c.b16 %v935, %v933
        %v966 = vpack.c.b16 %v938, %v936
        %v967 = vpack.c.b16 %v939, %v937
        %v968 = vpack.c.b16 %v942, %v940
        %v969 = vpack.c.b16 %v943, %v941
        %v970 = vpack.c.b16 %v946, %v944
        %v971 = vpack.c.b16 %v947, %v945
        %v972 = vpack.c.b16 %v950, %v948
        %v973 = vpack.c.b16 %v951, %v949
        %v974 = vpack.c.b16 %v954, %v952
        %v975 = vpack.c.b16 %v955, %v953
        %v976 = vpack.c.b16 %v958, %v956
        %v977 = vpack.c.b16 %v959, %v957
        %v978 = vpack.c.b16 %v962, %v960
        %v979 = vpack.c.b16 %v963, %v961
        %996 = vmatprep.subr.bf16.mxu0 %v979
        %997 = vmatpush1.bf16.msra.mxu0 %v978
        %998 = vmatprep.subr.bf16.mxu0 %v977
        %999 = vmatpush1.bf16.msra.mxu0 %v976
        %1000 = vmatprep.subr.bf16.mxu0 %v975
        %1001 = vmatpush1.bf16.msra.mxu0 %v974
        %1002 = vmatprep.subr.bf16.mxu0 %v973
        %1003 = vmatpush1.bf16.msra.mxu0 %v972
        %1004 = vmatprep.subr.bf16.mxu0 %v971
        %1005 = vmatpush1.bf16.msra.mxu0 %v970
        %1006 = vmatprep.subr.bf16.mxu0 %v969
        %1007 = vmatpush1.bf16.msra.mxu0 %v968
        %1008 = vmatprep.subr.bf16.mxu0 %v967
        %1009 = vmatpush1.bf16.msra.mxu0 %v966
        %1010 = vmatprep.subr.bf16.mxu0 %v965
        %1011 = vmatpush1.bf16.msra.mxu0 %v964
        %1012 = vmatprep.subr.bf16.mxu0 0
        %1013 = vmatpush2.bf16.msra.mxu0 0
        %1014 = vmatprep.subr.bf16.mxu0 0
        %1015 = vmatpush2.bf16.msra.mxu0 0
        %1016 = vmatprep.subr.bf16.mxu0 0
        %1017 = vmatpush2.bf16.msra.mxu0 0
        %1018 = vmatprep.subr.bf16.mxu0 0
        %1019 = vmatpush2.bf16.msra.mxu0 0
        %1020 = vmatprep.subr.bf16.mxu0 0
        %1021 = vmatpush2.bf16.msra.mxu0 0
        %1022 = vmatprep.subr.bf16.mxu0 0
        %1023 = vmatpush2.bf16.msra.mxu0 0
        %1024 = vmatprep.subr.bf16.mxu0 0
        %1025 = vmatpush2.bf16.msra.mxu0 0
        %1026 = vmatprep.subr.bf16.mxu0 0
        %1027 = vmatpush2.bf16.msra.mxu0 0
        %1028 = vmatprep.mubr.bf16.mxu0 0
        %1029 = vmatmul.mubr.bf16.gmra.mxu0 %v879
        %v1030 = vpop.f32.mrf.mxu0
        %v1031 = vadd.f32 %v909, %v1030
        %v1032 = vpop.f32.mrf.mxu0
        %v1033 = vadd.f32 %v913, %v1032
        %v1034 = vpop.f32.mrf.mxu0
        %v1035 = vadd.f32 %v909, %v1034
        %v1036 = vpop.f32.mrf.mxu0
        %v1037 = vadd.f32 %v913, %v1036
        %1038 = vmatprep.mubr.bf16.mxu0 0
        %1039 = vmatmul.mubr.bf16.gmra.mxu0 %v880
        %v1040 = vpop.f32.mrf.mxu0
        %v1041 = vadd.f32 %v909, %v1040
        %v1042 = vpop.f32.mrf.mxu0
        %v1043 = vadd.f32 %v913, %v1042
        %v1044 = vpop.f32.mrf.mxu0
        %v1045 = vadd.f32 %v909, %v1044
        %v1046 = vpop.f32.mrf.mxu0
        %v1047 = vadd.f32 %v913, %v1046
        %1048 = vmatprep.mubr.bf16.mxu0 0
        %1049 = vmatmul.mubr.bf16.gmra.mxu0 %v881
        %v1050 = vpop.f32.mrf.mxu0
        %v1051 = vadd.f32 %v909, %v1050
        %v1052 = vpop.f32.mrf.mxu0
        %v1053 = vadd.f32 %v913, %v1052
        %v1054 = vpop.f32.mrf.mxu0
        %v1055 = vadd.f32 %v909, %v1054
        %v1056 = vpop.f32.mrf.mxu0
        %v1057 = vadd.f32 %v913, %v1056
        %1058 = vmatprep.mubr.bf16.mxu0 0
        %1059 = vmatmul.mubr.bf16.gmra.mxu0 %v882
        %v1060 = vpop.f32.mrf.mxu0
        %v1061 = vadd.f32 %v909, %v1060
        %v1062 = vpop.f32.mrf.mxu0
        %v1063 = vadd.f32 %v913, %v1062
        %v1064 = vpop.f32.mrf.mxu0
        %v1065 = vadd.f32 %v909, %v1064
        %v1066 = vpop.f32.mrf.mxu0
        %v1067 = vadd.f32 %v913, %v1066
        %1068 = vmatprep.mubr.bf16.mxu0 0
        %1069 = vmatmul.mubr.bf16.gmra.mxu0 %v883
        %v1070 = vpop.f32.mrf.mxu0
        %v1071 = vadd.f32 %v909, %v1070
        %v1072 = vpop.f32.mrf.mxu0
        %v1073 = vadd.f32 %v913, %v1072
        %v1074 = vpop.f32.mrf.mxu0
        %v1075 = vadd.f32 %v909, %v1074
        %v1076 = vpop.f32.mrf.mxu0
        %v1077 = vadd.f32 %v913, %v1076
        %1078 = vmatprep.mubr.bf16.mxu0 0
        %1079 = vmatmul.mubr.bf16.gmra.mxu0 %v884
        %v1080 = vpop.f32.mrf.mxu0
        %v1081 = vadd.f32 %v909, %v1080
        %v1082 = vpop.f32.mrf.mxu0
        %v1083 = vadd.f32 %v913, %v1082
        %v1084 = vpop.f32.mrf.mxu0
        %v1085 = vadd.f32 %v909, %v1084
        %v1086 = vpop.f32.mrf.mxu0
        %v1087 = vadd.f32 %v913, %v1086
        %1088 = vmatprep.mubr.bf16.mxu0 0
        %1089 = vmatmul.mubr.bf16.gmra.mxu0 %v885
        %v1090 = vpop.f32.mrf.mxu0
        %v1091 = vadd.f32 %v909, %v1090
        %v1092 = vpop.f32.mrf.mxu0
        %v1093 = vadd.f32 %v913, %v1092
        %v1094 = vpop.f32.mrf.mxu0
        %v1095 = vadd.f32 %v909, %v1094
        %v1096 = vpop.f32.mrf.mxu0
        %v1097 = vadd.f32 %v913, %v1096
        %1098 = vmatprep.mubr.bf16.mxu0 0
        %1099 = vmatmul.mubr.bf16.gmra.mxu0 %v886
        %v1100 = vpop.f32.mrf.mxu0
        %v1101 = vadd.f32 %v909, %v1100
        %v1102 = vpop.f32.mrf.mxu0
        %v1103 = vadd.f32 %v913, %v1102
        %v1104 = vpop.f32.mrf.mxu0
        %v1105 = vadd.f32 %v909, %v1104
        %v1106 = vpop.f32.mrf.mxu0
        %v1107 = vadd.f32 %v913, %v1106
        %1108 = vdwg.mxu0
        %v1109 = vmax.f32 %v1031, 0.0
        %v1110 = vmax.f32 %v1033, 0.0
        %v1111 = vmax.f32 %v1035, 0.0
        %v1112 = vmax.f32 %v1037, 0.0
        %v1113 = vmax.f32 %v1041, 0.0
        %v1114 = vmax.f32 %v1043, 0.0
        %v1115 = vmax.f32 %v1045, 0.0
        %v1116 = vmax.f32 %v1047, 0.0
        %v1117 = vmax.f32 %v1051, 0.0
        %v1118 = vmax.f32 %v1053, 0.0
        %v1119 = vmax.f32 %v1055, 0.0
        %v1120 = vmax.f32 %v1057, 0.0
        %v1121 = vmax.f32 %v1061, 0.0
        %v1122 = vmax.f32 %v1063, 0.0
        %v1123 = vmax.f32 %v1065, 0.0
        %v1124 = vmax.f32 %v1067, 0.0
        %v1125 = vmax.f32 %v1071, 0.0
        %v1126 = vmax.f32 %v1073, 0.0
        %v1127 = vmax.f32 %v1075, 0.0
        %v1128 = vmax.f32 %v1077, 0.0
        %v1129 = vmax.f32 %v1081, 0.0
        %v1130 = vmax.f32 %v1083, 0.0
        %v1131 = vmax.f32 %v1085, 0.0
        %v1132 = vmax.f32 %v1087, 0.0
        %v1133 = vmax.f32 %v1091, 0.0
        %v1134 = vmax.f32 %v1093, 0.0
        %v1135 = vmax.f32 %v1095, 0.0
        %v1136 = vmax.f32 %v1097, 0.0
        %v1137 = vmax.f32 %v1101, 0.0
        %v1138 = vmax.f32 %v1103, 0.0
        %v1139 = vmax.f32 %v1105, 0.0
        %v1140 = vmax.f32 %v1107, 0.0
        %v1141 = vmax.f32 %v1109, %v1113
        %v1142 = vmax.f32 %v1111, %v1115
        %v1143 = vmax.f32 %v1141, %v1117
        %v1144 = vmax.f32 %v1142, %v1119
        %v1145 = vmax.f32 %v1143, %v1121
        %v1146 = vmax.f32 %v1144, %v1123
        %v1147 = vmax.f32 %v1145, %v1125
        %v1148 = vmax.f32 %v1146, %v1127
        %v1149 = vmax.f32 %v1147, %v1129
        %v1150 = vmax.f32 %v1148, %v1131
        %v1151 = vmax.f32 %v1149, %v1133
        %v1152 = vmax.f32 %v1150, %v1135
        %v1153 = vmax.f32 %v1151, %v1137
        %v1154 = vmax.f32 %v1152, %v1139
        %v1155 = vmax.f32 %v1153, %v1154
        %v1156 = vrot.slane %v1155, 4
        %v1157 = vmax.f32 %v1155, %v1156
        %v1158 = vrot.slane %v1157, 2
        %v1159 = vmax.f32 %v1157, %v1158
        %v1160 = vrot.slane %v1159, 1
        %v1161 = vmax.f32 %v1159, %v1160
        %v1162 = vmax.f32 %v1110, %v1114
        %v1163 = vmax.f32 %v1112, %v1116
        %v1164 = vmax.f32 %v1162, %v1118
        %v1165 = vmax.f32 %v1163, %v1120
        %v1166 = vmax.f32 %v1164, %v1122
        %v1167 = vmax.f32 %v1165, %v1124
        %v1168 = vmax.f32 %v1166, %v1126
        %v1169 = vmax.f32 %v1167, %v1128
        %v1170 = vmax.f32 %v1168, %v1130
        %v1171 = vmax.f32 %v1169, %v1132
        %v1172 = vmax.f32 %v1170, %v1134
        %v1173 = vmax.f32 %v1171, %v1136
        %v1174 = vmax.f32 %v1172, %v1138
        %v1175 = vmax.f32 %v1173, %v1140
        %v1176 = vmax.f32 %v1174, %v1175
        %v1177 = vrot.slane %v1176, 4
        %v1178 = vmax.f32 %v1176, %v1177
        %v1179 = vrot.slane %v1178, 2
        %v1180 = vmax.f32 %v1178, %v1179
        %v1181 = vrot.slane %v1180, 1
        %v1182 = vmax.f32 %v1180, %v1181
        %v1183 = vpack.c.bf16 %v1161, %v1161
        %v1184 = vpack.c.bf16 %v1182, %v1182
        %v1185 = vld [vmem:[#allocation2 + $0x130] sm:$0xf]
        %v1186 = vld [vmem:[#allocation2 + $0x138] sm:$0xf]
        %v1187 = vld [vmem:[#allocation2 + $0x140] sm:$0xf]
        %v1188 = vld [vmem:[#allocation2 + $0x148] sm:$0xf]
        %v1189 = vld [vmem:[#allocation2 + $0x150] sm:$0xf]
        %v1190 = vld [vmem:[#allocation2 + $0x158] sm:$0xf]
        %v1191 = vld [vmem:[#allocation2 + $0x160] sm:$0xf]
        %v1192 = vld [vmem:[#allocation2 + $0x168] sm:$0xf]
        %v1193 = vld [vmem:[#allocation2 + $0x170] sm:$0xf]
        %v1194 = vld [vmem:[#allocation2 + $0x178] sm:$0xf]
        %v1195 = vld [vmem:[#allocation2 + $0x180] sm:$0xf]
        %v1196 = vld [vmem:[#allocation2 + $0x188] sm:$0xf]
        %v1197 = vld [vmem:[#allocation2 + $0x190] sm:$0xf]
        %v1198 = vld [vmem:[#allocation2 + $0x198] sm:$0xf]
        %v1199 = vld [vmem:[#allocation2 + $0x1a0] sm:$0xf]
        %v1200 = vld [vmem:[#allocation2 + $0x1a8] sm:$0xf]
        %v1201 = vld [vmem:[#allocation2 + $0x1b0] sm:$0xf]
        %v1202 = vld [vmem:[#allocation2 + $0x1b8] sm:$0xf]
        %v1203 = vld [vmem:[#allocation2 + $0x1c0] sm:$0xf]
        %v1204 = vld [vmem:[#allocation2 + $0x1c8] sm:$0xf]
        %v1205 = vld [vmem:[#allocation2 + $0x1d0] sm:$0xf]
        %v1206 = vld [vmem:[#allocation2 + $0x1d8] sm:$0xf]
        %v1207 = vld [vmem:[#allocation2 + $0x1e0] sm:$0xf]
        %v1208 = vld [vmem:[#allocation2 + $0x1e8] sm:$0xf]
        %v1209 = vld [vmem:[#allocation2 + $0x1f0] sm:$0xf]
        %v1210 = vld [vmem:[#allocation2 + $0x1f8] sm:$0xf]
        %v1211 = vld [vmem:[#allocation2 + $0x200] sm:$0xf]
        %v1212 = vld [vmem:[#allocation2 + $0x208] sm:$0xf]
        %v1213 = vld [vmem:[#allocation2 + $0x210] sm:$0xf]
        %v1214 = vld [vmem:[#allocation2 + $0x218] sm:$0xf]
        %v1215 = vld [vmem:[#allocation2 + $0x220] sm:$0xf]
        %v1216 = vld [vmem:[#allocation2 + $0x228] sm:$0xf]
        %v1249 = vunpack.c.l.b16 %v1185
        %v1250 = vunpack.c.l.b16 %v1186
        %v1251 = vunpack.c.l.b16 %v1187
        %v1252 = vunpack.c.l.b16 %v1188
        %v1253 = vunpack.c.l.b16 %v1189
        %v1254 = vunpack.c.l.b16 %v1190
        %v1255 = vunpack.c.l.b16 %v1191
        %v1256 = vunpack.c.l.b16 %v1192
        %v1257 = vunpack.c.l.b16 %v1193
        %v1258 = vunpack.c.l.b16 %v1194
        %v1259 = vunpack.c.l.b16 %v1195
        %v1260 = vunpack.c.l.b16 %v1196
        %v1261 = vunpack.c.l.b16 %v1197
        %v1262 = vunpack.c.l.b16 %v1198
        %v1263 = vunpack.c.l.b16 %v1199
        %v1264 = vunpack.c.l.b16 %v1200
        %v1265 = vunpack.c.l.b16 %v1201
        %v1266 = vunpack.c.l.b16 %v1202
        %v1267 = vunpack.c.l.b16 %v1203
        %v1268 = vunpack.c.l.b16 %v1204
        %v1269 = vunpack.c.l.b16 %v1205
        %v1270 = vunpack.c.l.b16 %v1206
        %v1271 = vunpack.c.l.b16 %v1207
        %v1272 = vunpack.c.l.b16 %v1208
        %v1273 = vunpack.c.l.b16 %v1209
        %v1274 = vunpack.c.l.b16 %v1210
        %v1275 = vunpack.c.l.b16 %v1211
        %v1276 = vunpack.c.l.b16 %v1212
        %v1277 = vunpack.c.l.b16 %v1213
        %v1278 = vunpack.c.l.b16 %v1214
        %v1279 = vunpack.c.l.b16 %v1215
        %v1280 = vunpack.c.l.b16 %v1216
        %v1281 = vpack.c.b16 %v1250, %v1249
        %v1282 = vpack.c.b16 %v1252, %v1251
        %v1283 = vpack.c.b16 %v1254, %v1253
        %v1284 = vpack.c.b16 %v1256, %v1255
        %v1285 = vpack.c.b16 %v1258, %v1257
        %v1286 = vpack.c.b16 %v1260, %v1259
        %v1287 = vpack.c.b16 %v1262, %v1261
        %v1288 = vpack.c.b16 %v1264, %v1263
        %v1289 = vpack.c.b16 %v1266, %v1265
        %v1290 = vpack.c.b16 %v1268, %v1267
        %v1291 = vpack.c.b16 %v1270, %v1269
        %v1292 = vpack.c.b16 %v1272, %v1271
        %v1293 = vpack.c.b16 %v1274, %v1273
        %v1294 = vpack.c.b16 %v1276, %v1275
        %v1295 = vpack.c.b16 %v1278, %v1277
        %v1296 = vpack.c.b16 %v1280, %v1279
        %1313 = vmatprep.subr.bf16.mxu0 0
        %1314 = vmatpush1.bf16.msra.mxu0 %v1288
        %1315 = vmatprep.subr.bf16.mxu0 0
        %1316 = vmatpush1.bf16.msra.mxu0 %v1287
        %1317 = vmatprep.subr.bf16.mxu0 0
        %1318 = vmatpush1.bf16.msra.mxu0 %v1286
        %1319 = vmatprep.subr.bf16.mxu0 0
        %1320 = vmatpush1.bf16.msra.mxu0 %v1285
        %1321 = vmatprep.subr.bf16.mxu0 0
        %1322 = vmatpush1.bf16.msra.mxu0 %v1284
        %1323 = vmatprep.subr.bf16.mxu0 0
        %1324 = vmatpush1.bf16.msra.mxu0 %v1283
        %1325 = vmatprep.subr.bf16.mxu0 0
        %1326 = vmatpush1.bf16.msra.mxu0 %v1282
        %1327 = vmatprep.subr.bf16.mxu0 0
        %1328 = vmatpush1.bf16.msra.mxu0 %v1281
        %1329 = vmatprep.subr.bf16.mxu0 0
        %1330 = vmatpush2.bf16.msra.mxu0 %v1296
        %1331 = vmatprep.subr.bf16.mxu0 0
        %1332 = vmatpush2.bf16.msra.mxu0 %v1295
        %1333 = vmatprep.subr.bf16.mxu0 0
        %1334 = vmatpush2.bf16.msra.mxu0 %v1294
        %1335 = vmatprep.subr.bf16.mxu0 0
        %1336 = vmatpush2.bf16.msra.mxu0 %v1293
        %1337 = vmatprep.subr.bf16.mxu0 0
        %1338 = vmatpush2.bf16.msra.mxu0 %v1292
        %1339 = vmatprep.subr.bf16.mxu0 0
        %1340 = vmatpush2.bf16.msra.mxu0 %v1291
        %1341 = vmatprep.subr.bf16.mxu0 0
        %1342 = vmatpush2.bf16.msra.mxu0 %v1290
        %1343 = vmatprep.subr.bf16.mxu0 0
        %1344 = vmatpush2.bf16.msra.mxu0 %v1289
        %1345 = vmatprep.mubr.bf16.mxu0 %v1184
        %1346 = vmatmul.mubr.bf16.gmra.mxu0 %v1183
        %v1347 = vpop.f32.mrf.mxu0
        %v1348 = vadd.f32 0.0, %v1347
        %v1349 = vpop.f32.mrf.mxu0
        %v1350 = vpop.f32.mrf.mxu0
        %v1351 = vpop.f32.mrf.mxu0
        %1352 = vdwg.mxu0
        %v1353 = vld [vmem:[#allocation2 + $0x230] sm:$0xf]
        %v1354 = vld [vmem:[#allocation2 + $0x238] sm:$0xf]
        %v1355 = vld [vmem:[#allocation2 + $0x240] sm:$0xf]
        %v1356 = vld [vmem:[#allocation2 + $0x248] sm:$0xf]
        %v1357 = vld [vmem:[#allocation2 + $0x250] sm:$0xf]
        %v1358 = vld [vmem:[#allocation2 + $0x258] sm:$0xf]
        %v1359 = vld [vmem:[#allocation2 + $0x260] sm:$0xf]
        %v1360 = vld [vmem:[#allocation2 + $0x268] sm:$0xf]
        %v1369 = vunpack.c.l.b16 %v1353
        %v1370 = vunpack.c.l.b16 %v1354
        %v1371 = vunpack.c.l.b16 %v1355
        %v1372 = vunpack.c.l.b16 %v1356
        %v1373 = vunpack.c.l.b16 %v1357
        %v1374 = vunpack.c.l.b16 %v1358
        %v1375 = vunpack.c.l.b16 %v1359
        %v1376 = vunpack.c.l.b16 %v1360
        %v1377 = vpack.c.b16 %v1370, %v1369
        %v1378 = vpack.c.b16 %v1372, %v1371
        %v1379 = vpack.c.b16 %v1374, %v1373
        %v1380 = vpack.c.b16 %v1376, %v1375
        %1385 = vmatprep.subr.bf16.mxu0 0
        %1386 = vmatpush1.bf16.msra.mxu0 0
        %1387 = vmatprep.subr.bf16.mxu0 0
        %1388 = vmatpush1.bf16.msra.mxu0 0
        %1389 = vmatprep.subr.bf16.mxu0 0
        %1390 = vmatpush1.bf16.msra.mxu0 0
        %1391 = vmatprep.subr.bf16.mxu0 0
        %1392 = vmatpush1.bf16.msra.mxu0 0
        %1393 = vmatprep.subr.bf16.mxu0 0
        %1394 = vmatpush1.bf16.msra.mxu0 %v1380
        %1395 = vmatprep.subr.bf16.mxu0 0
        %1396 = vmatpush1.bf16.msra.mxu0 %v1379
        %1397 = vmatprep.subr.bf16.mxu0 0
        %1398 = vmatpush1.bf16.msra.mxu0 %v1378
        %1399 = vmatprep.subr.bf16.mxu0 0
        %1400 = vmatpush1.bf16.msra.mxu0 %v1377
        %1401 = vmatprep.subr.bf16.mxu0 0
        %1402 = vmatpush2.bf16.msra.mxu0 0
        %1403 = vmatprep.subr.bf16.mxu0 0
        %1404 = vmatpush2.bf16.msra.mxu0 0
        %1405 = vmatprep.subr.bf16.mxu0 0
        %1406 = vmatpush2.bf16.msra.mxu0 0
        %1407 = vmatprep.subr.bf16.mxu0 0
        %1408 = vmatpush2.bf16.msra.mxu0 0
        %1409 = vmatprep.subr.bf16.mxu0 0
        %1410 = vmatpush2.bf16.msra.mxu0 0
        %1411 = vmatprep.subr.bf16.mxu0 0
        %1412 = vmatpush2.bf16.msra.mxu0 0
        %1413 = vmatprep.subr.bf16.mxu0 0
        %1414 = vmatpush2.bf16.msra.mxu0 0
        %1415 = vmatprep.subr.bf16.mxu0 0
        %1416 = vmatpush2.bf16.msra.mxu0 0
        %1417 = vmatprep.mubr.bf16.mxu0 0
        %1418 = vmatmul.mubr.bf16.gmra.mxu0 %v565
        %v1419 = vpop.f32.mrf.mxu0
        %v1420 = vadd.f32 0.0, %v1419
        %v1421 = vpop.f32.mrf.mxu0
        %v1422 = vpop.f32.mrf.mxu0
        %v1423 = vadd.f32 0.0, %v1422
        %v1424 = vpop.f32.mrf.mxu0
        %1425 = vmatprep.mubr.bf16.mxu0 0
        %1426 = vmatmul.mubr.bf16.gmra.mxu0 %v568
        %v1427 = vpop.f32.mrf.mxu0
        %v1428 = vadd.f32 0.0, %v1427
        %v1429 = vpop.f32.mrf.mxu0
        %v1430 = vpop.f32.mrf.mxu0
        %v1431 = vadd.f32 0.0, %v1430
        %v1432 = vpop.f32.mrf.mxu0
        %1433 = vmatprep.mubr.bf16.mxu0 0
        %1434 = vmatmul.mubr.bf16.gmra.mxu0 %v571
        %v1435 = vpop.f32.mrf.mxu0
        %v1436 = vadd.f32 0.0, %v1435
        %v1437 = vpop.f32.mrf.mxu0
        %v1438 = vpop.f32.mrf.mxu0
        %v1439 = vadd.f32 0.0, %v1438
        %v1440 = vpop.f32.mrf.mxu0
        %1441 = vmatprep.mubr.bf16.mxu0 0
        %1442 = vmatmul.mubr.bf16.gmra.mxu0 %v574
        %v1443 = vpop.f32.mrf.mxu0
        %v1444 = vadd.f32 0.0, %v1443
        %v1445 = vpop.f32.mrf.mxu0
        %v1446 = vpop.f32.mrf.mxu0
        %v1447 = vadd.f32 0.0, %v1446
        %v1448 = vpop.f32.mrf.mxu0
        %1449 = vmatprep.mubr.bf16.mxu0 0
        %1450 = vmatmul.mubr.bf16.gmra.mxu0 %v577
        %v1451 = vpop.f32.mrf.mxu0
        %v1452 = vadd.f32 0.0, %v1451
        %v1453 = vpop.f32.mrf.mxu0
        %v1454 = vpop.f32.mrf.mxu0
        %v1455 = vadd.f32 0.0, %v1454
        %v1456 = vpop.f32.mrf.mxu0
        %1457 = vmatprep.mubr.bf16.mxu0 0
        %1458 = vmatmul.mubr.bf16.gmra.mxu0 %v580
        %v1459 = vpop.f32.mrf.mxu0
        %v1460 = vadd.f32 0.0, %v1459
        %v1461 = vpop.f32.mrf.mxu0
        %v1462 = vpop.f32.mrf.mxu0
        %v1463 = vadd.f32 0.0, %v1462
        %v1464 = vpop.f32.mrf.mxu0
        %1465 = vmatprep.mubr.bf16.mxu0 0
        %1466 = vmatmul.mubr.bf16.gmra.mxu0 %v583
        %v1467 = vpop.f32.mrf.mxu0
        %v1468 = vadd.f32 0.0, %v1467
        %v1469 = vpop.f32.mrf.mxu0
        %v1470 = vpop.f32.mrf.mxu0
        %v1471 = vadd.f32 0.0, %v1470
        %v1472 = vpop.f32.mrf.mxu0
        %1473 = vmatprep.mubr.bf16.mxu0 0
        %1474 = vmatmul.mubr.bf16.gmra.mxu0 %v586
        %v1475 = vpop.f32.mrf.mxu0
        %v1476 = vadd.f32 0.0, %v1475
        %v1477 = vpop.f32.mrf.mxu0
        %v1478 = vpop.f32.mrf.mxu0
        %v1479 = vadd.f32 0.0, %v1478
        %v1480 = vpop.f32.mrf.mxu0
        %1481 = vdwg.mxu0
        %v1482 = vld [vmem:[%s2 + $0x5] ss:$0 sm:$0xff]
        %v1483 = vlaneseq
        %v1484 = vshrl.u32 %v1483, 7
        %v1485 = vsub.s32 0, %v1484
        %v1486 = vrot.slane %v1348, %v1485
        %v1487 = vadd.f32 %v1420, %v1486
        %v1488 = vadd.f32 %v1423, %v1486
        %v1489 = vadd.f32 %v1428, %v1486
        %v1490 = vadd.f32 %v1431, %v1486
        %v1491 = vadd.f32 %v1436, %v1486
        %v1492 = vadd.f32 %v1439, %v1486
        %v1493 = vadd.f32 %v1444, %v1486
        %v1494 = vadd.f32 %v1447, %v1486
        %v1495 = vadd.f32 %v1452, %v1486
        %v1496 = vadd.f32 %v1455, %v1486
        %v1497 = vadd.f32 %v1460, %v1486
        %v1498 = vadd.f32 %v1463, %v1486
        %v1499 = vadd.f32 %v1468, %v1486
        %v1500 = vadd.f32 %v1471, %v1486
        %v1501 = vadd.f32 %v1476, %v1486
        %v1502 = vadd.f32 %v1479, %v1486
        %v1503 = vadd.f32 %v1487, %v1482
        %v1504 = vadd.f32 %v1488, %v1482
        %v1505 = vadd.f32 %v1489, %v1482
        %v1506 = vadd.f32 %v1490, %v1482
        %v1507 = vadd.f32 %v1491, %v1482
        %v1508 = vadd.f32 %v1492, %v1482
        %v1509 = vadd.f32 %v1493, %v1482
        %v1510 = vadd.f32 %v1494, %v1482
        %v1511 = vadd.f32 %v1495, %v1482
        %v1512 = vadd.f32 %v1496, %v1482
        %v1513 = vadd.f32 %v1497, %v1482
        %v1514 = vadd.f32 %v1498, %v1482
        %v1515 = vadd.f32 %v1499, %v1482
        %v1516 = vadd.f32 %v1500, %v1482
        %v1517 = vadd.f32 %v1501, %v1482
        %v1518 = vadd.f32 %v1502, %v1482
        %v1519 = vmax.f32 %v1503, 0.0
        %v1520 = vmax.f32 %v1504, 0.0
        %v1521 = vmax.f32 %v1505, 0.0
        %v1522 = vmax.f32 %v1506, 0.0
        %v1523 = vmax.f32 %v1507, 0.0
        %v1524 = vmax.f32 %v1508, 0.0
        %v1525 = vmax.f32 %v1509, 0.0
        %v1526 = vmax.f32 %v1510, 0.0
        %v1527 = vmax.f32 %v1511, 0.0
        %v1528 = vmax.f32 %v1512, 0.0
        %v1529 = vmax.f32 %v1513, 0.0
        %v1530 = vmax.f32 %v1514, 0.0
        %v1531 = vmax.f32 %v1515, 0.0
        %v1532 = vmax.f32 %v1516, 0.0
        %v1533 = vmax.f32 %v1517, 0.0
        %v1534 = vmax.f32 %v1518, 0.0
        %v1535 = vpack.c.bf16 %v1520, %v1519
        %v1536 = vpack.c.bf16 %v1522, %v1521
        %v1537 = vpack.c.bf16 %v1524, %v1523
        %v1538 = vpack.c.bf16 %v1526, %v1525
        %v1539 = vpack.c.bf16 %v1528, %v1527
        %v1540 = vpack.c.bf16 %v1530, %v1529
        %v1541 = vpack.c.bf16 %v1532, %v1531
        %v1542 = vpack.c.bf16 %v1534, %v1533
        %v1543 = vld [vmem:[#allocation2 + $0x270] sm:$0xf]
        %v1544 = vld [vmem:[#allocation2 + $0x278] sm:$0xf]
        %v1545 = vld [vmem:[#allocation2 + $0x280] sm:$0xf]
        %v1546 = vld [vmem:[#allocation2 + $0x288] sm:$0xf]
        %v1547 = vld [vmem:[#allocation2 + $0x290] sm:$0xf]
        %v1548 = vld [vmem:[#allocation2 + $0x298] sm:$0xf]
        %v1549 = vld [vmem:[#allocation2 + $0x2a0] sm:$0xf]
        %v1550 = vld [vmem:[#allocation2 + $0x2a8] sm:$0xf]
        %v1551 = vld [vmem:[#allocation2 + $0x2b0] sm:$0xf]
        %v1552 = vld [vmem:[#allocation2 + $0x2b8] sm:$0xf]
        %v1553 = vld [vmem:[#allocation2 + $0x2c0] sm:$0xf]
        %v1554 = vld [vmem:[#allocation2 + $0x2c8] sm:$0xf]
        %v1555 = vld [vmem:[#allocation2 + $0x2d0] sm:$0xf]
        %v1556 = vld [vmem:[#allocation2 + $0x2d8] sm:$0xf]
        %v1557 = vld [vmem:[#allocation2 + $0x2e0] sm:$0xf]
        %v1558 = vld [vmem:[#allocation2 + $0x2e8] sm:$0xf]
        %v1559 = vld [vmem:[%s2 + $0x6] ss:$0 sm:$0xff]
        %v1576 = vunpack.c.l.b16 %v1543
        %v1577 = vunpack.c.l.b16 %v1544
        %v1578 = vunpack.c.l.b16 %v1545
        %v1579 = vunpack.c.l.b16 %v1546
        %v1580 = vunpack.c.l.b16 %v1547
        %v1581 = vunpack.c.l.b16 %v1548
        %v1582 = vunpack.c.l.b16 %v1549
        %v1583 = vunpack.c.l.b16 %v1550
        %v1584 = vunpack.c.l.b16 %v1551
        %v1585 = vunpack.c.l.b16 %v1552
        %v1586 = vunpack.c.l.b16 %v1553
        %v1587 = vunpack.c.l.b16 %v1554
        %v1588 = vunpack.c.l.b16 %v1555
        %v1589 = vunpack.c.l.b16 %v1556
        %v1590 = vunpack.c.l.b16 %v1557
        %v1591 = vunpack.c.l.b16 %v1558
        %v1592 = vpack.c.b16 %v1577, %v1576
        %v1593 = vpack.c.b16 %v1579, %v1578
        %v1594 = vpack.c.b16 %v1581, %v1580
        %v1595 = vpack.c.b16 %v1583, %v1582
        %v1596 = vpack.c.b16 %v1585, %v1584
        %v1597 = vpack.c.b16 %v1587, %v1586
        %v1598 = vpack.c.b16 %v1589, %v1588
        %v1599 = vpack.c.b16 %v1591, %v1590
        %1608 = vmatprep.subr.bf16.mxu0 0
        %1609 = vmatpush1.bf16.msra.mxu0 %v1599
        %1610 = vmatprep.subr.bf16.mxu0 0
        %1611 = vmatpush1.bf16.msra.mxu0 %v1598
        %1612 = vmatprep.subr.bf16.mxu0 0
        %1613 = vmatpush1.bf16.msra.mxu0 %v1597
        %1614 = vmatprep.subr.bf16.mxu0 0
        %1615 = vmatpush1.bf16.msra.mxu0 %v1596
        %1616 = vmatprep.subr.bf16.mxu0 0
        %1617 = vmatpush1.bf16.msra.mxu0 %v1595
        %1618 = vmatprep.subr.bf16.mxu0 0
        %1619 = vmatpush1.bf16.msra.mxu0 %v1594
        %1620 = vmatprep.subr.bf16.mxu0 0
        %1621 = vmatpush1.bf16.msra.mxu0 %v1593
        %1622 = vmatprep.subr.bf16.mxu0 0
        %1623 = vmatpush1.bf16.msra.mxu0 %v1592
        %1624 = vmatprep.subr.bf16.mxu0 0
        %1625 = vmatpush2.bf16.msra.mxu0 0
        %1626 = vmatprep.subr.bf16.mxu0 0
        %1627 = vmatpush2.bf16.msra.mxu0 0
        %1628 = vmatprep.subr.bf16.mxu0 0
        %1629 = vmatpush2.bf16.msra.mxu0 0
        %1630 = vmatprep.subr.bf16.mxu0 0
        %1631 = vmatpush2.bf16.msra.mxu0 0
        %1632 = vmatprep.subr.bf16.mxu0 0
        %1633 = vmatpush2.bf16.msra.mxu0 0
        %1634 = vmatprep.subr.bf16.mxu0 0
        %1635 = vmatpush2.bf16.msra.mxu0 0
        %1636 = vmatprep.subr.bf16.mxu0 0
        %1637 = vmatpush2.bf16.msra.mxu0 0
        %1638 = vmatprep.subr.bf16.mxu0 0
        %1639 = vmatpush2.bf16.msra.mxu0 0
        %1640 = vmatprep.mubr.bf16.mxu0 0
        %1641 = vmatmul.mubr.bf16.gmra.mxu0 %v1535
        %v1642 = vpop.f32.mrf.mxu0
        %v1643 = vadd.f32 %v1559, %v1642
        %v1644 = vpop.f32.mrf.mxu0
        %v1645 = vpop.f32.mrf.mxu0
        %v1646 = vadd.f32 %v1559, %v1645
        %v1647 = vpop.f32.mrf.mxu0
        %1648 = vmatprep.mubr.bf16.mxu0 0
        %1649 = vmatmul.mubr.bf16.gmra.mxu0 %v1536
        %v1650 = vpop.f32.mrf.mxu0
        %v1651 = vadd.f32 %v1559, %v1650
        %v1652 = vpop.f32.mrf.mxu0
        %v1653 = vpop.f32.mrf.mxu0
        %v1654 = vadd.f32 %v1559, %v1653
        %v1655 = vpop.f32.mrf.mxu0
        %1656 = vmatprep.mubr.bf16.mxu0 0
        %1657 = vmatmul.mubr.bf16.gmra.mxu0 %v1537
        %v1658 = vpop.f32.mrf.mxu0
        %v1659 = vadd.f32 %v1559, %v1658
        %v1660 = vpop.f32.mrf.mxu0
        %v1661 = vpop.f32.mrf.mxu0
        %v1662 = vadd.f32 %v1559, %v1661
        %v1663 = vpop.f32.mrf.mxu0
        %1664 = vmatprep.mubr.bf16.mxu0 0
        %1665 = vmatmul.mubr.bf16.gmra.mxu0 %v1538
        %v1666 = vpop.f32.mrf.mxu0
        %v1667 = vadd.f32 %v1559, %v1666
        %v1668 = vpop.f32.mrf.mxu0
        %v1669 = vpop.f32.mrf.mxu0
        %v1670 = vadd.f32 %v1559, %v1669
        %v1671 = vpop.f32.mrf.mxu0
        %1672 = vmatprep.mubr.bf16.mxu0 0
        %1673 = vmatmul.mubr.bf16.gmra.mxu0 %v1539
        %v1674 = vpop.f32.mrf.mxu0
        %v1675 = vadd.f32 %v1559, %v1674
        %v1676 = vpop.f32.mrf.mxu0
        %v1677 = vpop.f32.mrf.mxu0
        %v1678 = vadd.f32 %v1559, %v1677
        %v1679 = vpop.f32.mrf.mxu0
        %1680 = vmatprep.mubr.bf16.mxu0 0
        %1681 = vmatmul.mubr.bf16.gmra.mxu0 %v1540
        %v1682 = vpop.f32.mrf.mxu0
        %v1683 = vadd.f32 %v1559, %v1682
        %v1684 = vpop.f32.mrf.mxu0
        %v1685 = vpop.f32.mrf.mxu0
        %v1686 = vadd.f32 %v1559, %v1685
        %v1687 = vpop.f32.mrf.mxu0
        %1688 = vmatprep.mubr.bf16.mxu0 0
        %1689 = vmatmul.mubr.bf16.gmra.mxu0 %v1541
        %v1690 = vpop.f32.mrf.mxu0
        %v1691 = vadd.f32 %v1559, %v1690
        %v1692 = vpop.f32.mrf.mxu0
        %v1693 = vpop.f32.mrf.mxu0
        %v1694 = vadd.f32 %v1559, %v1693
        %v1695 = vpop.f32.mrf.mxu0
        %1696 = vmatprep.mubr.bf16.mxu0 0
        %1697 = vmatmul.mubr.bf16.gmra.mxu0 %v1542
        %v1698 = vpop.f32.mrf.mxu0
        %v1699 = vadd.f32 %v1559, %v1698
        %v1700 = vpop.f32.mrf.mxu0
        %v1701 = vpop.f32.mrf.mxu0
        %v1702 = vadd.f32 %v1559, %v1701
        %v1703 = vpop.f32.mrf.mxu0
        %1704 = vdwg.mxu0
        %v1705 = vmax.f32 %v1643, 0.0
        %v1706 = vmax.f32 %v1646, 0.0
        %v1707 = vmax.f32 %v1651, 0.0
        %v1708 = vmax.f32 %v1654, 0.0
        %v1709 = vmax.f32 %v1659, 0.0
        %v1710 = vmax.f32 %v1662, 0.0
        %v1711 = vmax.f32 %v1667, 0.0
        %v1712 = vmax.f32 %v1670, 0.0
        %v1713 = vmax.f32 %v1675, 0.0
        %v1714 = vmax.f32 %v1678, 0.0
        %v1715 = vmax.f32 %v1683, 0.0
        %v1716 = vmax.f32 %v1686, 0.0
        %v1717 = vmax.f32 %v1691, 0.0
        %v1718 = vmax.f32 %v1694, 0.0
        %v1719 = vmax.f32 %v1699, 0.0
        %v1720 = vmax.f32 %v1702, 0.0
        %v1721 = vpack.c.bf16 %v1706, %v1705
        %v1722 = vpack.c.bf16 %v1708, %v1707
        %v1723 = vpack.c.bf16 %v1710, %v1709
        %v1724 = vpack.c.bf16 %v1712, %v1711
        %v1725 = vpack.c.bf16 %v1714, %v1713
        %v1726 = vpack.c.bf16 %v1716, %v1715
        %v1727 = vpack.c.bf16 %v1718, %v1717
        %v1728 = vpack.c.bf16 %v1720, %v1719
        %v1729 = vld [vmem:[#allocation2 + $0x2f0] sm:$0xf]
        %v1730 = vld [vmem:[#allocation2 + $0x2f8] sm:$0xf]
        %v1731 = vld [vmem:[#allocation2 + $0x300] sm:$0xf]
        %v1732 = vld [vmem:[#allocation2 + $0x308] sm:$0xf]
        %v1733 = vld [vmem:[#allocation2 + $0x310] sm:$0xf]
        %v1734 = vld [vmem:[#allocation2 + $0x318] sm:$0xf]
        %v1735 = vld [vmem:[#allocation2 + $0x320] sm:$0xf]
        %v1736 = vld [vmem:[#allocation2 + $0x328] sm:$0xf]
        %v1737 = vld [vmem:[%s2 + $0x7] ss:$0 sm:$0xff]
        %v1746 = vunpack.c.l.b16 %v1729
        %v1747 = vunpack.c.l.b16 %v1730
        %v1748 = vunpack.c.l.b16 %v1731
        %v1749 = vunpack.c.l.b16 %v1732
        %v1750 = vunpack.c.l.b16 %v1733
        %v1751 = vunpack.c.l.b16 %v1734
        %v1752 = vunpack.c.l.b16 %v1735
        %v1753 = vunpack.c.l.b16 %v1736
        %v1754 = vpack.c.b16 %v1747, %v1746
        %v1755 = vpack.c.b16 %v1749, %v1748
        %v1756 = vpack.c.b16 %v1751, %v1750
        %v1757 = vpack.c.b16 %v1753, %v1752
        %v1763 = vsel %vm563, %v1721, 0
        %v1766 = vsel %vm563, %v1722, 0
        %v1769 = vsel %vm563, %v1723, 0
        %v1772 = vsel %vm563, %v1724, 0
        %v1775 = vsel %vm563, %v1725, 0
        %v1778 = vsel %vm563, %v1726, 0
        %v1781 = vsel %vm563, %v1727, 0
        %v1784 = vsel %vm563, %v1728, 0
        %1786 = vmatprep.subr.bf16.mxu0 0
        %1787 = vmatpush1.bf16.msra.mxu0 0
        %1788 = vmatprep.subr.bf16.mxu0 0
        %1789 = vmatpush1.bf16.msra.mxu0 0
        %1790 = vmatprep.subr.bf16.mxu0 0
        %1791 = vmatpush1.bf16.msra.mxu0 0
        %1792 = vmatprep.subr.bf16.mxu0 0
        %1793 = vmatpush1.bf16.msra.mxu0 0
        %1794 = vmatprep.subr.bf16.mxu0 0
        %1795 = vmatpush1.bf16.msra.mxu0 %v1757
        %1796 = vmatprep.subr.bf16.mxu0 0
        %1797 = vmatpush1.bf16.msra.mxu0 %v1756
        %1798 = vmatprep.subr.bf16.mxu0 0
        %1799 = vmatpush1.bf16.msra.mxu0 %v1755
        %1800 = vmatprep.subr.bf16.mxu0 0
        %1801 = vmatpush1.bf16.msra.mxu0 %v1754
        %1802 = vmatprep.subr.bf16.mxu0 0
        %1803 = vmatpush2.bf16.msra.mxu0 0
        %1804 = vmatprep.subr.bf16.mxu0 0
        %1805 = vmatpush2.bf16.msra.mxu0 0
        %1806 = vmatprep.subr.bf16.mxu0 0
        %1807 = vmatpush2.bf16.msra.mxu0 0
        %1808 = vmatprep.subr.bf16.mxu0 0
        %1809 = vmatpush2.bf16.msra.mxu0 0
        %1810 = vmatprep.subr.bf16.mxu0 0
        %1811 = vmatpush2.bf16.msra.mxu0 0
        %1812 = vmatprep.subr.bf16.mxu0 0
        %1813 = vmatpush2.bf16.msra.mxu0 0
        %1814 = vmatprep.subr.bf16.mxu0 0
        %1815 = vmatpush2.bf16.msra.mxu0 0
        %1816 = vmatprep.subr.bf16.mxu0 0
        %1817 = vmatpush2.bf16.msra.mxu0 0
        %1818 = vmatprep.mubr.bf16.mxu0 0
        %1819 = vmatmul.mubr.bf16.gmra.mxu0 %v1763
        %v1820 = vpop.f32.mrf.mxu0
        %v1821 = vadd.f32 %v1737, %v1820
        %v1822 = vpop.f32.mrf.mxu0
        %v1823 = vpop.f32.mrf.mxu0
        %v1824 = vadd.f32 %v1737, %v1823
        %v1825 = vpop.f32.mrf.mxu0
        %1826 = vmatprep.mubr.bf16.mxu0 0
        %1827 = vmatmul.mubr.bf16.gmra.mxu0 %v1766
        %v1828 = vpop.f32.mrf.mxu0
        %v1829 = vadd.f32 %v1737, %v1828
        %v1830 = vpop.f32.mrf.mxu0
        %v1831 = vpop.f32.mrf.mxu0
        %v1832 = vadd.f32 %v1737, %v1831
        %v1833 = vpop.f32.mrf.mxu0
        %1834 = vmatprep.mubr.bf16.mxu0 0
        %1835 = vmatmul.mubr.bf16.gmra.mxu0 %v1769
        %v1836 = vpop.f32.mrf.mxu0
        %v1837 = vadd.f32 %v1737, %v1836
        %v1838 = vpop.f32.mrf.mxu0
        %v1839 = vpop.f32.mrf.mxu0
        %v1840 = vadd.f32 %v1737, %v1839
        %v1841 = vpop.f32.mrf.mxu0
        %1842 = vmatprep.mubr.bf16.mxu0 0
        %1843 = vmatmul.mubr.bf16.gmra.mxu0 %v1772
        %v1844 = vpop.f32.mrf.mxu0
        %v1845 = vadd.f32 %v1737, %v1844
        %v1846 = vpop.f32.mrf.mxu0
        %v1847 = vpop.f32.mrf.mxu0
        %v1848 = vadd.f32 %v1737, %v1847
        %v1849 = vpop.f32.mrf.mxu0
        %1850 = vmatprep.mubr.bf16.mxu0 0
        %1851 = vmatmul.mubr.bf16.gmra.mxu0 %v1775
        %v1852 = vpop.f32.mrf.mxu0
        %v1853 = vadd.f32 %v1737, %v1852
        %v1854 = vpop.f32.mrf.mxu0
        %v1855 = vpop.f32.mrf.mxu0
        %v1856 = vadd.f32 %v1737, %v1855
        %v1857 = vpop.f32.mrf.mxu0
        %1858 = vmatprep.mubr.bf16.mxu0 0
        %1859 = vmatmul.mubr.bf16.gmra.mxu0 %v1778
        %v1860 = vpop.f32.mrf.mxu0
        %v1861 = vadd.f32 %v1737, %v1860
        %v1862 = vpop.f32.mrf.mxu0
        %v1863 = vpop.f32.mrf.mxu0
        %v1864 = vadd.f32 %v1737, %v1863
        %v1865 = vpop.f32.mrf.mxu0
        %1866 = vmatprep.mubr.bf16.mxu0 0
        %1867 = vmatmul.mubr.bf16.gmra.mxu0 %v1781
        %v1868 = vpop.f32.mrf.mxu0
        %v1869 = vadd.f32 %v1737, %v1868
        %v1870 = vpop.f32.mrf.mxu0
        %v1871 = vpop.f32.mrf.mxu0
        %v1872 = vadd.f32 %v1737, %v1871
        %v1873 = vpop.f32.mrf.mxu0
        %1874 = vmatprep.mubr.bf16.mxu0 0
        %1875 = vmatmul.mubr.bf16.gmra.mxu0 %v1784
        %v1876 = vpop.f32.mrf.mxu0
        %v1877 = vadd.f32 %v1737, %v1876
        %v1878 = vpop.f32.mrf.mxu0
        %v1879 = vpop.f32.mrf.mxu0
        %v1880 = vadd.f32 %v1737, %v1879
        %v1881 = vpop.f32.mrf.mxu0
        %1882 = vdwg.mxu0
        %v1883 = vmax.f32 %v1821, 0.0
        %v1884 = vmax.f32 %v1824, 0.0
        %v1885 = vmax.f32 %v1829, 0.0
        %v1886 = vmax.f32 %v1832, 0.0
        %v1887 = vmax.f32 %v1837, 0.0
        %v1888 = vmax.f32 %v1840, 0.0
        %v1889 = vmax.f32 %v1845, 0.0
        %v1890 = vmax.f32 %v1848, 0.0
        %v1891 = vmax.f32 %v1853, 0.0
        %v1892 = vmax.f32 %v1856, 0.0
        %v1893 = vmax.f32 %v1861, 0.0
        %v1894 = vmax.f32 %v1864, 0.0
        %v1895 = vmax.f32 %v1869, 0.0
        %v1896 = vmax.f32 %v1872, 0.0
        %v1897 = vmax.f32 %v1877, 0.0
        %v1898 = vmax.f32 %v1880, 0.0
        %v1899 = vpack.c.bf16 %v1884, %v1883
        %v1900 = vpack.c.bf16 %v1886, %v1885
        %v1901 = vpack.c.bf16 %v1888, %v1887
        %v1902 = vpack.c.bf16 %v1890, %v1889
        %v1903 = vpack.c.bf16 %v1892, %v1891
        %v1904 = vpack.c.bf16 %v1894, %v1893
        %v1905 = vpack.c.bf16 %v1896, %v1895
        %v1906 = vpack.c.bf16 %v1898, %v1897
        %v1907 = vld [vmem:[#allocation2 + $0x330] sm:$0xf]
        %v1908 = vld [vmem:[#allocation2 + $0x338] sm:$0xf]
        %v1909 = vld [vmem:[#allocation2 + $0x340] sm:$0xf]
        %v1910 = vld [vmem:[#allocation2 + $0x348] sm:$0xf]
        %v1911 = vld [vmem:[%s2 + $0x10] ss:$0 sm:$0xff]
        %v1916 = vunpack.c.l.b16 %v1907
        %v1917 = vunpack.c.l.b16 %v1908
        %v1918 = vunpack.c.l.b16 %v1909
        %v1919 = vunpack.c.l.b16 %v1910
        %v1920 = vpack.c.b16 %v1917, %v1916
        %v1921 = vpack.c.b16 %v1919, %v1918
        %v1925 = vsel %vm384, %v1899, 0
        %v1928 = vsel %vm384, %v1900, 0
        %v1931 = vsel %vm384, %v1901, 0
        %v1934 = vsel %vm384, %v1902, 0
        %v1937 = vsel %vm384, %v1903, 0
        %v1940 = vsel %vm384, %v1904, 0
        %v1943 = vsel %vm384, %v1905, 0
        %v1946 = vsel %vm384, %v1906, 0
        %1948 = vmatprep.subr.bf16.mxu0 0
        %1949 = vmatpush1.bf16.msra.mxu0 0
        %1950 = vmatprep.subr.bf16.mxu0 0
        %1951 = vmatpush1.bf16.msra.mxu0 0
        %1952 = vmatprep.subr.bf16.mxu0 0
        %1953 = vmatpush1.bf16.msra.mxu0 0
        %1954 = vmatprep.subr.bf16.mxu0 0
        %1955 = vmatpush1.bf16.msra.mxu0 0
        %1956 = vmatprep.subr.bf16.mxu0 0
        %1957 = vmatpush1.bf16.msra.mxu0 0
        %1958 = vmatprep.subr.bf16.mxu0 0
        %1959 = vmatpush1.bf16.msra.mxu0 0
        %1960 = vmatprep.subr.bf16.mxu0 0
        %1961 = vmatpush1.bf16.msra.mxu0 %v1921
        %1962 = vmatprep.subr.bf16.mxu0 0
        %1963 = vmatpush1.bf16.msra.mxu0 %v1920
        %1964 = vmatprep.subr.bf16.mxu0 0
        %1965 = vmatpush2.bf16.msra.mxu0 0
        %1966 = vmatprep.subr.bf16.mxu0 0
        %1967 = vmatpush2.bf16.msra.mxu0 0
        %1968 = vmatprep.subr.bf16.mxu0 0
        %1969 = vmatpush2.bf16.msra.mxu0 0
        %1970 = vmatprep.subr.bf16.mxu0 0
        %1971 = vmatpush2.bf16.msra.mxu0 0
        %1972 = vmatprep.subr.bf16.mxu0 0
        %1973 = vmatpush2.bf16.msra.mxu0 0
        %1974 = vmatprep.subr.bf16.mxu0 0
        %1975 = vmatpush2.bf16.msra.mxu0 0
        %1976 = vmatprep.subr.bf16.mxu0 0
        %1977 = vmatpush2.bf16.msra.mxu0 0
        %1978 = vmatprep.subr.bf16.mxu0 0
        %1979 = vmatpush2.bf16.msra.mxu0 0
        %1980 = vmatprep.mubr.bf16.mxu0 0
        %1981 = vmatmul.mubr.bf16.gmra.mxu0 %v1925
        %v1982 = vpop.f32.mrf.mxu0
        %v1983 = vadd.f32 %v1911, %v1982
        %v1984 = vpop.f32.mrf.mxu0
        %v1985 = vpop.f32.mrf.mxu0
        %v1986 = vadd.f32 %v1911, %v1985
        %v1987 = vpop.f32.mrf.mxu0
        %1988 = vmatprep.mubr.bf16.mxu0 0
        %1989 = vmatmul.mubr.bf16.gmra.mxu0 %v1928
        %v1990 = vpop.f32.mrf.mxu0
        %v1991 = vadd.f32 %v1911, %v1990
        %v1992 = vpop.f32.mrf.mxu0
        %v1993 = vpop.f32.mrf.mxu0
        %v1994 = vadd.f32 %v1911, %v1993
        %v1995 = vpop.f32.mrf.mxu0
        %1996 = vmatprep.mubr.bf16.mxu0 0
        %1997 = vmatmul.mubr.bf16.gmra.mxu0 %v1931
        %v1998 = vpop.f32.mrf.mxu0
        %v1999 = vadd.f32 %v1911, %v1998
        %v2000 = vpop.f32.mrf.mxu0
        %v2001 = vpop.f32.mrf.mxu0
        %v2002 = vadd.f32 %v1911, %v2001
        %v2003 = vpop.f32.mrf.mxu0
        %2004 = vmatprep.mubr.bf16.mxu0 0
        %2005 = vmatmul.mubr.bf16.gmra.mxu0 %v1934
        %v2006 = vpop.f32.mrf.mxu0
        %v2007 = vadd.f32 %v1911, %v2006
        %v2008 = vpop.f32.mrf.mxu0
        %v2009 = vpop.f32.mrf.mxu0
        %v2010 = vadd.f32 %v1911, %v2009
        %v2011 = vpop.f32.mrf.mxu0
        %2012 = vmatprep.mubr.bf16.mxu0 0
        %2013 = vmatmul.mubr.bf16.gmra.mxu0 %v1937
        %v2014 = vpop.f32.mrf.mxu0
        %v2015 = vadd.f32 %v1911, %v2014
        %v2016 = vpop.f32.mrf.mxu0
        %v2017 = vpop.f32.mrf.mxu0
        %v2018 = vadd.f32 %v1911, %v2017
        %v2019 = vpop.f32.mrf.mxu0
        %2020 = vmatprep.mubr.bf16.mxu0 0
        %2021 = vmatmul.mubr.bf16.gmra.mxu0 %v1940
        %v2022 = vpop.f32.mrf.mxu0
        %v2023 = vadd.f32 %v1911, %v2022
        %v2024 = vpop.f32.mrf.mxu0
        %v2025 = vpop.f32.mrf.mxu0
        %v2026 = vadd.f32 %v1911, %v2025
        %v2027 = vpop.f32.mrf.mxu0
        %2028 = vmatprep.mubr.bf16.mxu0 0
        %2029 = vmatmul.mubr.bf16.gmra.mxu0 %v1943
        %v2030 = vpop.f32.mrf.mxu0
        %v2031 = vadd.f32 %v1911, %v2030
        %v2032 = vpop.f32.mrf.mxu0
        %v2033 = vpop.f32.mrf.mxu0
        %v2034 = vadd.f32 %v1911, %v2033
        %v2035 = vpop.f32.mrf.mxu0
        %2036 = vmatprep.mubr.bf16.mxu0 0
        %2037 = vmatmul.mubr.bf16.gmra.mxu0 %v1946
        %v2038 = vpop.f32.mrf.mxu0
        %v2039 = vadd.f32 %v1911, %v2038
        %v2040 = vpop.f32.mrf.mxu0
        %v2041 = vpop.f32.mrf.mxu0
        %v2042 = vadd.f32 %v1911, %v2041
        %v2043 = vpop.f32.mrf.mxu0
        %2044 = vdwg.mxu0
        %v2045 = vpack.c.bf16 %v1986, %v1983
        %v2046 = vpack.c.bf16 %v1994, %v1991
        %v2047 = vpack.c.bf16 %v2002, %v1999
        %v2048 = vpack.c.bf16 %v2010, %v2007
        %v2049 = vpack.c.bf16 %v2018, %v2015
        %v2050 = vpack.c.bf16 %v2026, %v2023
        %v2051 = vpack.c.bf16 %v2034, %v2031
        %v2052 = vpack.c.bf16 %v2042, %v2039
        %v2061 = vunpack.c.l.b16 %v2045
        %v2062 = vunpack.c.h.b16 %v2045
        %v2063 = vunpack.c.l.b16 %v2046
        %v2064 = vunpack.c.h.b16 %v2046
        %v2065 = vunpack.c.l.b16 %v2047
        %v2066 = vunpack.c.h.b16 %v2047
        %v2067 = vunpack.c.l.b16 %v2048
        %v2068 = vunpack.c.h.b16 %v2048
        %v2069 = vunpack.c.l.b16 %v2049
        %v2070 = vunpack.c.h.b16 %v2049
        %v2071 = vunpack.c.l.b16 %v2050
        %v2072 = vunpack.c.h.b16 %v2050
        %v2073 = vunpack.c.l.b16 %v2051
        %v2074 = vunpack.c.h.b16 %v2051
        %v2075 = vunpack.c.l.b16 %v2052
        %v2076 = vunpack.c.h.b16 %v2052
        %v2077 = vpack.c.b16 %v2061, %v2061
        %v2078 = vpack.c.b16 %v2062, %v2062
        %v2079 = vpack.c.b16 %v2063, %v2063
        %v2080 = vpack.c.b16 %v2064, %v2064
        %v2081 = vpack.c.b16 %v2065, %v2065
        %v2082 = vpack.c.b16 %v2066, %v2066
        %v2083 = vpack.c.b16 %v2067, %v2067
        %v2084 = vpack.c.b16 %v2068, %v2068
        %v2085 = vpack.c.b16 %v2069, %v2069
        %v2086 = vpack.c.b16 %v2070, %v2070
        %v2087 = vpack.c.b16 %v2071, %v2071
        %v2088 = vpack.c.b16 %v2072, %v2072
        %v2089 = vpack.c.b16 %v2073, %v2073
        %v2090 = vpack.c.b16 %v2074, %v2074
        %v2091 = vpack.c.b16 %v2075, %v2075
        %v2092 = vpack.c.b16 %v2076, %v2076
        %2109 = vst [vmem:[%s179] sm:$0xf] %v2077
        %2110 = vst [vmem:[%s179 + $0x4] sm:$0xf] %v2078
        %2111 = vst [vmem:[%s179 + $0x8] sm:$0xf] %v2079
        %2112 = vst [vmem:[%s179 + $0xc] sm:$0xf] %v2080
        %2113 = vst [vmem:[%s179 + $0x10] sm:$0xf] %v2081
        %2114 = vst [vmem:[%s179 + $0x14] sm:$0xf] %v2082
        %2115 = vst [vmem:[%s179 + $0x18] sm:$0xf] %v2083
        %2116 = vst [vmem:[%s179 + $0x1c] sm:$0xf] %v2084
        %2117 = vst [vmem:[%s179 + $0x20] sm:$0xf] %v2085
        %2118 = vst [vmem:[%s179 + $0x24] sm:$0xf] %v2086
        %2119 = vst [vmem:[%s179 + $0x28] sm:$0xf] %v2087
        %2120 = vst [vmem:[%s179 + $0x2c] sm:$0xf] %v2088
        %2121 = vst [vmem:[%s179 + $0x30] sm:$0xf] %v2089
        %2122 = vst [vmem:[%s179 + $0x34] sm:$0xf] %v2090
        %2123 = vst [vmem:[%s179 + $0x38] sm:$0xf] %v2091
        %2124 = vst [vmem:[%s179 + $0x3c] sm:$0xf] %v2092
        %s2125 = sand.u32 %s94, 1
        %s2126 = scalar_lea.sflag [#allocation4], %s2125
        %s2127 = sand.u32 %s94, 1
        %s2128 = smul.addr %s2127, 64
        %s2129 = scalar_lea.vmem [#allocation5], %s2128
        // Predicated region
        $region37: #{tpu_custom_call.1} parent=31 // pred_check
          %p2130 = pneg %p104
        $region38: #{tpu_custom_call.1} parent=31 // pred_check_branch
          %2132 = sbr.rel (%p2130) target = $region40
        $region39: #{tpu_custom_call.1} parent=31 // pred_region
          %s2133 = smul.u32 16, %s18
          %s2135 = ssub.s32 1024, 1024
          %2136 = vsyncadd %s2126, %s2135
          %s2137 = smul.addr %s2133, 64
          %s2138 = scalar_lea.hbm %s3, %s2137
          %s2139 = sshll.u32 %s2129, 4
          %s2140 = int_to_ptr.vmem [resolvable:$true] %s2139
          %2145 = dma.vmem_to_hbm [thread:$0]  %s2140, 1024, %s2138, %s2126, 64, 64, 4
        $region40: #{tpu_custom_call.1} parent=31 // pred_fallthru
          _
      $region32: #{tpu_custom_call.1} parent=5 // pred_fallthru
        _
      %p2146 = scmp.le.s32.totalorder 2, %s13
      // Predicated region
      $region41: #{tpu_custom_call.1} parent=5 // pred_check
        %p2147 = pneg %p2146
      $region42: #{tpu_custom_call.1} parent=5 // pred_check_branch
        %2149 = sbr.rel (%p2147) target = $region44
      $region43: #{tpu_custom_call.1} parent=5 // pred_region
        %s2150 = ssub.s32 %s13, 2
        // Predicated region
        $region45: #{tpu_custom_call.1} parent=43 // pred_check
          %p2151 = pneg %p110
        $region46: #{tpu_custom_call.1} parent=43 // pred_check_branch
          %2153 = sbr.rel (%p2151) target = $region48
        $region47: #{tpu_custom_call.1} parent=43 // pred_region
          %s2154 = sand.u32 %s95, 1
          %s2155 = scalar_lea.sflag [#allocation4], %s2154
          %s2156 = sand.u32 %s95, 1
          %s2157 = smul.addr %s2156, 64
          %s2158 = scalar_lea.vmem [#allocation5], %s2157
          %2159 = dma.done %s2155, 1024
        $region48: #{tpu_custom_call.1} parent=43 // pred_fallthru
          _
      $region44: #{tpu_custom_call.1} parent=5 // pred_fallthru
        _
    $region6: #{tpu_custom_call.1} parent=1 // loop_footer
      %s17 = sadd.s32 1, %s13
    $region7: #{tpu_custom_call.1} parent=1 // loop_footer_branch
      %12 = sbr.rel target = $region3
    $region8: #{tpu_custom_call.1} parent=1 // loop_exit
      _
    %2160 = vsyncpa [#allocation3], 1
    %s2161 = scalar_lea.sflag [#allocation3], 1
    %2162 = vsyncpa %s2161, 1
    %2163 = vsyncpa [#allocation4], 1
    %s2164 = scalar_lea.sflag [#allocation4], 1
    %2165 = vsyncpa %s2164, 1

</llo_original>
